<compile_context>
chip_gen: v7x
topology: tpu7x:2x2x1
jax: 0.10.0
libtpu: 0.0.40
codegen_flags: <defaults>
</compile_context>

<pallas_src>
import functools
import math

import jax
import jax.numpy as jnp
import numpy as np
from jax.experimental import pallas as pl
from jax.experimental.pallas import tpu as pltpu


def _sam_attention_kernel(q_ref, k_ref, v_ref,
                          wq_ref, bq_ref,
                          wk_ref, bk_ref,
                          wv_ref, bv_ref,
                          wo_ref, bo_ref,
                          o_ref,
                          *, num_heads, c_per_head, groups):
    g = groups
    nq = q_ref.shape[0] // g
    nk = k_ref.shape[0] // g
    c = c_per_head

    f32 = jnp.float32
    cdt = q_ref.dtype        # MXU operand dtype (pass bf16 inputs for bf16 MXU)

    # Full-width projections: one (G*N, H) @ (H, D) matmul each, f32 accumulate.
    # The 1/sqrt(c) query scale is already folded into wq/bq on the host.
    q_all = jnp.dot(q_ref[...], wq_ref[...], preferred_element_type=f32) + bq_ref[...]
    k_all = jnp.dot(k_ref[...], wk_ref[...], preferred_element_type=f32) + bk_ref[...]
    v_all = jnp.dot(v_ref[...], wv_ref[...], preferred_element_type=f32) + bv_ref[...]

    q_all = q_all.astype(cdt)
    k_all = k_all.astype(cdt)
    v_all = v_all.astype(cdt)

    # Per-head attention.  Static Python loop over heads; these matmuls have
    # inherently tiny contraction (c) and are cheap next to the projections.
    head_outs = []
    for h in range(num_heads):
        lo, hi = h * c, (h + 1) * c
        qh = q_all[:, lo:hi].reshape(g, nq, c)
        kh = k_all[:, lo:hi].reshape(g, nk, c)
        vh = v_all[:, lo:hi].reshape(g, nk, c)

        # Batched scores, contraction on the feature axis (no explicit .T).
        s = jnp.einsum("gqc,gkc->gqk", qh, kh, preferred_element_type=f32)

        # Numerically stable exp in f32; normalize AFTER the PV matmul.
        s = s - jnp.max(s, axis=-1, keepdims=True)
        p = jnp.exp(s)
        denom = jnp.sum(p, axis=-1, keepdims=True)               # (g, nq, 1)

        o_h = jnp.einsum("gqk,gkc->gqc", p.astype(cdt), vh,
                         preferred_element_type=f32)             # (g, nq, c)
        # approx=True would push this onto the EUP slot in production; kept
        # exact here to preserve 1e-5 parity with the f32 reference.
        o_h = o_h * pl.reciprocal(denom, approx=False)
        head_outs.append(o_h.reshape(g * nq, c))

    # Recombine heads along the lane axis, then one full-width out-projection.
    o_cat = jnp.concatenate(head_outs, axis=-1).astype(cdt)      # (g*nq, D)
    out = jnp.dot(o_cat, wo_ref[...], preferred_element_type=f32) + bo_ref[...]
    o_ref[...] = out.astype(o_ref.dtype)


def _pick_groups(bp, nq, nk, hidden, d, num_heads, itemsize, vmem_budget,
                 row_target=256):
    """Number of (batch, point) slices processed per grid step.

    Chooses G (a divisor of bp) so that the q/k/v row blocks are
    sublane-aligned, the estimated VMEM footprint fits `vmem_budget`, the
    query-side matmul M (= G*nq) reaches `row_target` rows when reachable
    (v5e already saturates at 128; 256 also fills v6e/v7x), and at least two
    grid steps remain when bp > 1 so v7x's second TensorCore gets work.
    """
    sub = 8 if itemsize >= 4 else 16   # sublane packing: f32 vs bf16/fp8

    def vmem_bytes(g):
        act_in = 2 * (g * nq + 2 * g * nk) * hidden * itemsize   # 2x-buffered q,k,v
        act_out = 2 * g * nq * hidden * itemsize                 # 2x-buffered out
        proj = (g * nq + 2 * g * nk) * d * 4                     # f32 projections
        scores = g * nq * nk * 4                                 # one head's scores
        weights = 2 * (4 * hidden * d + 3 * d + hidden) * itemsize
        return act_in + act_out + proj + scores + weights

    aligned = [g for g in range(1, bp + 1)
               if bp % g == 0 and g * nq % sub == 0 and g * nk % sub == 0]
    if not aligned:
        # TODO(synk): pad token counts to the sublane multiple instead of
        # falling back to one full-extent step (idles v7x's second core).
        return bp

    candidates = [g for g in aligned if vmem_bytes(g) <= vmem_budget]
    if not candidates:
        return min(aligned)

    multi = [g for g in candidates if bp // g >= 2]
    pool = multi if multi else candidates
    hit = [g for g in pool if g * nq >= row_target]
    # Smallest G hitting the row target keeps more parallel steps; otherwise
    # take the biggest tile that fits (amortizes per-step overhead).
    return min(hit) if hit else max(pool)


def sam_attention(query, key, value, params, num_heads, groups=None):
    """query/key/value: [B, P, N, hidden]; returns [B, P, Nq, hidden]."""
    B, P, Nq, H = query.shape
    _, _, Nk, _ = key.shape
    D = params["wq"].shape[1]                     # internal_dim
    assert D % num_heads == 0
    c = D // num_heads
    BP = B * P

    # Generation-aware VMEM budget (v5e/v6e: 128 MiB, v7x: 64 MiB per TC).
    try:
        vmem_cap = pltpu.get_tpu_info().vmem_capacity_bytes
    except Exception:
        vmem_cap = 64 * 1024 * 1024
    vmem_limit = max(32 * 1024 * 1024,
                     min(int(vmem_cap * 0.75), 96 * 1024 * 1024))

    itemsize = jnp.dtype(query.dtype).itemsize
    if groups is None:
        G = _pick_groups(BP, Nq, Nk, H, D, num_heads, itemsize,
                         vmem_budget=int(0.6 * vmem_limit))
    else:
        G = groups
    assert BP % G == 0
    n_steps = BP // G

    # Lane-major 2-D slabs (feature dim on the 128-lane axis).
    qf = query.reshape(BP * Nq, H)
    kf = key.reshape(BP * Nk, H)
    vf = value.reshape(BP * Nk, H)

    # Fold the 1/sqrt(c) attention scale into the query projection (one-time
    # transform of constant weights; removes an in-kernel full-slab multiply).
    scale = jnp.asarray(1.0 / math.sqrt(c), params["wq"].dtype)
    wq_s = params["wq"] * scale
    bq_s = params["bq"] * scale

    kernel = functools.partial(_sam_attention_kernel,
                               num_heads=num_heads, c_per_head=c, groups=G)

    def rows_spec(n):
        return pl.BlockSpec((G * n, H), lambda i: (i, 0))

    def const_spec(shape):
        return pl.BlockSpec(shape, lambda i: tuple(0 for _ in shape))

    out = pl.pallas_call(
        kernel,
        out_shape=jax.ShapeDtypeStruct((BP * Nq, H), query.dtype),
        grid=(n_steps,),
        in_specs=[
            rows_spec(Nq),                          # q
            rows_spec(Nk),                          # k
            rows_spec(Nk),                          # v
            const_spec((H, D)), const_spec((1, D)),  # q_proj (scale folded)
            const_spec((H, D)), const_spec((1, D)),  # k_proj
            const_spec((H, D)), const_spec((1, D)),  # v_proj
            const_spec((D, H)), const_spec((1, H)),  # out_proj
        ],
        out_specs=pl.BlockSpec((G * Nq, H), lambda i: (i, 0)),
        compiler_params=pltpu.CompilerParams(
            dimension_semantics=("parallel",),
            vmem_limit_bytes=vmem_limit),
    )(qf, kf, vf, wq_s, bq_s,
      params["wk"], params["bk"], params["wv"], params["bv"],
      params["wo"], params["bo"])

    return out.reshape(B, P, Nq, H)


def sam_attention_reference(query, key, value, params, num_heads):
    """Pure-JAX reference mirroring the PyTorch forward."""
    B, P, Nq, H = query.shape
    D = params["wq"].shape[1]
    c = D // num_heads

    q = query @ params["wq"] + params["bq"][0]
    k = key @ params["wk"] + params["bk"][0]
    v = value @ params["wv"] + params["bv"][0]

    def sep(x):
        b, p, t, d = x.shape
        return x.reshape(b * p, t, num_heads, c).transpose(0, 2, 1, 3)

    qh, kh, vh = sep(q), sep(k), sep(v)
    attn = jnp.einsum("bhqc,bhkc->bhqk", qh, kh) / math.sqrt(c)
    attn = jax.nn.softmax(attn, axis=-1)
    out = jnp.einsum("bhqk,bhkc->bhqc", attn, vh)
    out = out.transpose(0, 2, 1, 3).reshape(B, P, Nq, D)
    return out @ params["wo"] + params["bo"][0]


def init_params(key, hidden_size, internal_dim, dtype=jnp.float32):
    ks = jax.random.split(key, 8)
    s_in = 1.0 / math.sqrt(hidden_size)
    s_d = 1.0 / math.sqrt(internal_dim)
    return {
        # stored as (in, out) = W^T of nn.Linear
        "wq": jax.random.normal(ks[0], (hidden_size, internal_dim), dtype) * s_in,
        "bq": jax.random.normal(ks[1], (1, internal_dim), dtype) * s_in,
        "wk": jax.random.normal(ks[2], (hidden_size, internal_dim), dtype) * s_in,
        "bk": jax.random.normal(ks[3], (1, internal_dim), dtype) * s_in,
        "wv": jax.random.normal(ks[4], (hidden_size, internal_dim), dtype) * s_in,
        "bv": jax.random.normal(ks[5], (1, internal_dim), dtype) * s_in,
        "wo": jax.random.normal(ks[6], (internal_dim, hidden_size), dtype) * s_d,
        "bo": jax.random.normal(ks[7], (1, hidden_size), dtype) * s_d,
    }


if __name__ == "__main__":
    # Small SAM-like config: hidden=32, downsample_rate=2 -> internal_dim=16,
    # num_attention_heads=2 -> c_per_head=8.
    B, P, Nq, Nk = 2, 2, 8, 16
    hidden_size, downsample_rate, num_heads = 32, 2, 2
    internal_dim = hidden_size // downsample_rate

    root = jax.random.PRNGKey(0)
    k_q, k_k, k_v, k_p = jax.random.split(root, 4)

    query = jax.random.normal(k_q, (B, P, Nq, hidden_size), jnp.float32)
    key = jax.random.normal(k_k, (B, P, Nk, hidden_size), jnp.float32)
    value = jax.random.normal(k_v, (B, P, Nk, hidden_size), jnp.float32)
    params = init_params(k_p, hidden_size, internal_dim)

    out = sam_attention(query, key, value, params, num_heads)
    out = jax.block_until_ready(out)

    ref = jax.block_until_ready(
        sam_attention_reference(query, key, value, params, num_heads))

    assert out.shape == (B, P, Nq, hidden_size)
    np.testing.assert_allclose(np.asarray(out), np.asarray(ref),
                               rtol=1e-5, atol=2e-5)
    print("KERNEL_OK")
</pallas_src>

<mosaic_0001>
module attributes {stable_mosaic.version = 11 : i64} {
  func.func @_sam_attention_kernel(%arg0: i32, %arg1: memref<16x32xf32, #tpu.memory_space<vmem>>, %arg2: memref<32x32xf32, #tpu.memory_space<vmem>>, %arg3: memref<32x32xf32, #tpu.memory_space<vmem>>, %arg4: memref<32x16xf32, #tpu.memory_space<vmem>>, %arg5: memref<1x16xf32, #tpu.memory_space<vmem>>, %arg6: memref<32x16xf32, #tpu.memory_space<vmem>>, %arg7: memref<1x16xf32, #tpu.memory_space<vmem>>, %arg8: memref<32x16xf32, #tpu.memory_space<vmem>>, %arg9: memref<1x16xf32, #tpu.memory_space<vmem>>, %arg10: memref<16x32xf32, #tpu.memory_space<vmem>>, %arg11: memref<1x32xf32, #tpu.memory_space<vmem>>, %arg12: memref<16x32xf32, #tpu.memory_space<vmem>>) attributes {dimension_semantics = [#tpu.dimension_semantics<parallel>], iteration_bounds = array<i64: 2>, scalar_prefetch = 0 : i64, scratch_operands = 0 : i64, tpu.core_type = #tpu.core_type<tc>, window_params = [{transform_indices = @transform_0, window_bounds = array<i64: 16, 32>}, {transform_indices = @transform_1, window_bounds = array<i64: 32, 32>}, {transform_indices = @transform_2, window_bounds = array<i64: 32, 32>}, {pipeline_mode = #tpu.pipeline_mode<synchronous>, transform_indices = @transform_3, window_bounds = array<i64: 32, 16>}, {pipeline_mode = #tpu.pipeline_mode<synchronous>, transform_indices = @transform_4, window_bounds = array<i64: 1, 16>}, {pipeline_mode = #tpu.pipeline_mode<synchronous>, transform_indices = @transform_5, window_bounds = array<i64: 32, 16>}, {pipeline_mode = #tpu.pipeline_mode<synchronous>, transform_indices = @transform_6, window_bounds = array<i64: 1, 16>}, {pipeline_mode = #tpu.pipeline_mode<synchronous>, transform_indices = @transform_7, window_bounds = array<i64: 32, 16>}, {pipeline_mode = #tpu.pipeline_mode<synchronous>, transform_indices = @transform_8, window_bounds = array<i64: 1, 16>}, {pipeline_mode = #tpu.pipeline_mode<synchronous>, transform_indices = @transform_9, window_bounds = array<i64: 16, 32>}, {pipeline_mode = #tpu.pipeline_mode<synchronous>, transform_indices = @transform_10, window_bounds = array<i64: 1, 32>}, {transform_indices = @transform_11, window_bounds = array<i64: 16, 32>}]} {
    %c0 = arith.constant 0 : index
    %c0_0 = arith.constant 0 : index
    %0 = vector.load %arg1[%c0, %c0_0] : memref<16x32xf32, #tpu.memory_space<vmem>>, vector<16x32xf32>
    %c0_1 = arith.constant 0 : index
    %c0_2 = arith.constant 0 : index
    %1 = vector.load %arg4[%c0_1, %c0_2] : memref<32x16xf32, #tpu.memory_space<vmem>>, vector<32x16xf32>
    %cst = arith.constant dense<0.000000e+00> : vector<16x16xf32>
    %2 = tpu.matmul %0, %1, %cst {dimension_numbers = #tpu.dot_dimension_numbers<[1], [0], [0], [1], [0, 0, 1, 1], [], []>} : vector<16x32xf32>, vector<32x16xf32>, vector<16x16xf32> -> vector<16x16xf32>
    %c0_3 = arith.constant 0 : index
    %c0_4 = arith.constant 0 : index
    %3 = vector.load %arg5[%c0_3, %c0_4] : memref<1x16xf32, #tpu.memory_space<vmem>>, vector<1x16xf32>
    %4 = vector.broadcast %3 : vector<1x16xf32> to vector<16x16xf32>
    %5 = arith.addf %2, %4 : vector<16x16xf32>
    %c0_5 = arith.constant 0 : index
    %c0_6 = arith.constant 0 : index
    %6 = vector.load %arg2[%c0_5, %c0_6] : memref<32x32xf32, #tpu.memory_space<vmem>>, vector<32x32xf32>
    %c0_7 = arith.constant 0 : index
    %c0_8 = arith.constant 0 : index
    %7 = vector.load %arg6[%c0_7, %c0_8] : memref<32x16xf32, #tpu.memory_space<vmem>>, vector<32x16xf32>
    %cst_9 = arith.constant dense<0.000000e+00> : vector<32x16xf32>
    %8 = tpu.matmul %6, %7, %cst_9 {dimension_numbers = #tpu.dot_dimension_numbers<[1], [0], [0], [1], [0, 0, 1, 1], [], []>} : vector<32x32xf32>, vector<32x16xf32>, vector<32x16xf32> -> vector<32x16xf32>
    %c0_10 = arith.constant 0 : index
    %c0_11 = arith.constant 0 : index
    %9 = vector.load %arg7[%c0_10, %c0_11] : memref<1x16xf32, #tpu.memory_space<vmem>>, vector<1x16xf32>
    %10 = vector.broadcast %9 : vector<1x16xf32> to vector<32x16xf32>
    %11 = arith.addf %8, %10 : vector<32x16xf32>
    %c0_12 = arith.constant 0 : index
    %c0_13 = arith.constant 0 : index
    %12 = vector.load %arg3[%c0_12, %c0_13] : memref<32x32xf32, #tpu.memory_space<vmem>>, vector<32x32xf32>
    %c0_14 = arith.constant 0 : index
    %c0_15 = arith.constant 0 : index
    %13 = vector.load %arg8[%c0_14, %c0_15] : memref<32x16xf32, #tpu.memory_space<vmem>>, vector<32x16xf32>
    %cst_16 = arith.constant dense<0.000000e+00> : vector<32x16xf32>
    %14 = tpu.matmul %12, %13, %cst_16 {dimension_numbers = #tpu.dot_dimension_numbers<[1], [0], [0], [1], [0, 0, 1, 1], [], []>} : vector<32x32xf32>, vector<32x16xf32>, vector<32x16xf32> -> vector<32x16xf32>
    %c0_17 = arith.constant 0 : index
    %c0_18 = arith.constant 0 : index
    %15 = vector.load %arg9[%c0_17, %c0_18] : memref<1x16xf32, #tpu.memory_space<vmem>>, vector<1x16xf32>
    %16 = vector.broadcast %15 : vector<1x16xf32> to vector<32x16xf32>
    %17 = arith.addf %14, %16 : vector<32x16xf32>
    %18 = vector.extract_strided_slice %5 {offsets = [0, 0], sizes = [16, 8], strides = [1, 1]} : vector<16x16xf32> to vector<16x8xf32>
    %19 = vector.shape_cast %18 : vector<16x8xf32> to vector<2x8x8xf32>
    %20 = vector.extract_strided_slice %11 {offsets = [0, 0], sizes = [32, 8], strides = [1, 1]} : vector<32x16xf32> to vector<32x8xf32>
    %21 = vector.shape_cast %20 : vector<32x8xf32> to vector<2x16x8xf32>
    %22 = vector.extract_strided_slice %17 {offsets = [0, 0], sizes = [32, 8], strides = [1, 1]} : vector<32x16xf32> to vector<32x8xf32>
    %23 = vector.shape_cast %22 : vector<32x8xf32> to vector<2x16x8xf32>
    "tpu.trace_start"() <{level = 10 : i32, message = "gqc,gkc->gqk"}> : () -> ()
    %cst_19 = arith.constant dense<0.000000e+00> : vector<2x8x16xf32>
    %24 = tpu.matmul %19, %21, %cst_19 {dimension_numbers = #tpu.dot_dimension_numbers<[2], [2], [1], [1], [0, 0, 0, 1, 1, 1], [0], [0]>} : vector<2x8x8xf32>, vector<2x16x8xf32>, vector<2x8x16xf32> -> vector<2x8x16xf32>
    "tpu.trace_stop"() : () -> ()
    %cst_20 = arith.constant dense<0xFF800000> : vector<2x8xf32>
    %25 = vector.multi_reduction <maximumf>, %24, %cst_20 [2] : vector<2x8x16xf32> to vector<2x8xf32>
    %26 = vector.shape_cast %25 : vector<2x8xf32> to vector<2x8x1xf32>
    %27 = vector.broadcast %26 : vector<2x8x1xf32> to vector<2x8x16xf32>
    %28 = arith.subf %24, %27 : vector<2x8x16xf32>
    %29 = math.exp %28 : vector<2x8x16xf32>
    %cst_21 = arith.constant dense<0.000000e+00> : vector<2x8xf32>
    %30 = vector.multi_reduction <add>, %29, %cst_21 [2] : vector<2x8x16xf32> to vector<2x8xf32>
    %31 = vector.shape_cast %30 : vector<2x8xf32> to vector<2x8x1xf32>
    "tpu.trace_start"() <{level = 10 : i32, message = "gqk,gkc->gqc"}> : () -> ()
    %cst_22 = arith.constant dense<0.000000e+00> : vector<2x8x8xf32>
    %32 = tpu.matmul %29, %23, %cst_22 {dimension_numbers = #tpu.dot_dimension_numbers<[2], [1], [1], [2], [0, 0, 0, 1, 1, 2], [0], [0]>} : vector<2x8x16xf32>, vector<2x16x8xf32>, vector<2x8x8xf32> -> vector<2x8x8xf32>
    "tpu.trace_stop"() : () -> ()
    %33 = tpu.reciprocal %31 : vector<2x8x1xf32> -> vector<2x8x1xf32>
    %34 = vector.broadcast %33 : vector<2x8x1xf32> to vector<2x8x8xf32>
    %35 = arith.mulf %32, %34 : vector<2x8x8xf32>
    %36 = vector.shape_cast %35 : vector<2x8x8xf32> to vector<16x8xf32>
    %37 = vector.extract_strided_slice %5 {offsets = [0, 8], sizes = [16, 8], strides = [1, 1]} : vector<16x16xf32> to vector<16x8xf32>
    %38 = vector.shape_cast %37 : vector<16x8xf32> to vector<2x8x8xf32>
    %39 = vector.extract_strided_slice %11 {offsets = [0, 8], sizes = [32, 8], strides = [1, 1]} : vector<32x16xf32> to vector<32x8xf32>
    %40 = vector.shape_cast %39 : vector<32x8xf32> to vector<2x16x8xf32>
    %41 = vector.extract_strided_slice %17 {offsets = [0, 8], sizes = [32, 8], strides = [1, 1]} : vector<32x16xf32> to vector<32x8xf32>
    %42 = vector.shape_cast %41 : vector<32x8xf32> to vector<2x16x8xf32>
    "tpu.trace_start"() <{level = 10 : i32, message = "gqc,gkc->gqk"}> : () -> ()
    %cst_23 = arith.constant dense<0.000000e+00> : vector<2x8x16xf32>
    %43 = tpu.matmul %38, %40, %cst_23 {dimension_numbers = #tpu.dot_dimension_numbers<[2], [2], [1], [1], [0, 0, 0, 1, 1, 1], [0], [0]>} : vector<2x8x8xf32>, vector<2x16x8xf32>, vector<2x8x16xf32> -> vector<2x8x16xf32>
    "tpu.trace_stop"() : () -> ()
    %cst_24 = arith.constant dense<0xFF800000> : vector<2x8xf32>
    %44 = vector.multi_reduction <maximumf>, %43, %cst_24 [2] : vector<2x8x16xf32> to vector<2x8xf32>
    %45 = vector.shape_cast %44 : vector<2x8xf32> to vector<2x8x1xf32>
    %46 = vector.broadcast %45 : vector<2x8x1xf32> to vector<2x8x16xf32>
    %47 = arith.subf %43, %46 : vector<2x8x16xf32>
    %48 = math.exp %47 : vector<2x8x16xf32>
    %cst_25 = arith.constant dense<0.000000e+00> : vector<2x8xf32>
    %49 = vector.multi_reduction <add>, %48, %cst_25 [2] : vector<2x8x16xf32> to vector<2x8xf32>
    %50 = vector.shape_cast %49 : vector<2x8xf32> to vector<2x8x1xf32>
    "tpu.trace_start"() <{level = 10 : i32, message = "gqk,gkc->gqc"}> : () -> ()
    %cst_26 = arith.constant dense<0.000000e+00> : vector<2x8x8xf32>
    %51 = tpu.matmul %48, %42, %cst_26 {dimension_numbers = #tpu.dot_dimension_numbers<[2], [1], [1], [2], [0, 0, 0, 1, 1, 2], [0], [0]>} : vector<2x8x16xf32>, vector<2x16x8xf32>, vector<2x8x8xf32> -> vector<2x8x8xf32>
    "tpu.trace_stop"() : () -> ()
    %52 = tpu.reciprocal %50 : vector<2x8x1xf32> -> vector<2x8x1xf32>
    %53 = vector.broadcast %52 : vector<2x8x1xf32> to vector<2x8x8xf32>
    %54 = arith.mulf %51, %53 : vector<2x8x8xf32>
    %55 = vector.shape_cast %54 : vector<2x8x8xf32> to vector<16x8xf32>
    %56 = tpu.concatenate %36, %55 in 1 : vector<16x8xf32>, vector<16x8xf32> -> vector<16x16xf32>
    %c0_27 = arith.constant 0 : index
    %c0_28 = arith.constant 0 : index
    %57 = vector.load %arg10[%c0_27, %c0_28] : memref<16x32xf32, #tpu.memory_space<vmem>>, vector<16x32xf32>
    %cst_29 = arith.constant dense<0.000000e+00> : vector<16x32xf32>
    %58 = tpu.matmul %56, %57, %cst_29 {dimension_numbers = #tpu.dot_dimension_numbers<[1], [0], [0], [1], [0, 0, 1, 1], [], []>} : vector<16x16xf32>, vector<16x32xf32>, vector<16x32xf32> -> vector<16x32xf32>
    %c0_30 = arith.constant 0 : index
    %c0_31 = arith.constant 0 : index
    %59 = vector.load %arg11[%c0_30, %c0_31] : memref<1x32xf32, #tpu.memory_space<vmem>>, vector<1x32xf32>
    %60 = vector.broadcast %59 : vector<1x32xf32> to vector<16x32xf32>
    %61 = arith.addf %58, %60 : vector<16x32xf32>
    %c0_32 = arith.constant 0 : index
    %c0_33 = arith.constant 0 : index
    %62 = vector.load %arg12[%c0_32, %c0_33] : memref<16x32xf32, #tpu.memory_space<vmem>>, vector<16x32xf32>
    tpu.vector_store %arg12[%c0_32, %c0_33], %61 {strides = array<i32>} : memref<16x32xf32, #tpu.memory_space<vmem>>, vector<16x32xf32>,
    return
  }
  func.func @transform_0(%arg0: i32) -> (i32, i32) {
    %c0_i32 = arith.constant 0 : i32
    %c0_i32_0 = arith.constant 0 : i32
    return %arg0, %c0_i32 : i32, i32
  }
  func.func @transform_1(%arg0: i32) -> (i32, i32) {
    %c0_i32 = arith.constant 0 : i32
    %c0_i32_0 = arith.constant 0 : i32
    return %arg0, %c0_i32 : i32, i32
  }
  func.func @transform_2(%arg0: i32) -> (i32, i32) {
    %c0_i32 = arith.constant 0 : i32
    %c0_i32_0 = arith.constant 0 : i32
    return %arg0, %c0_i32 : i32, i32
  }
  func.func @transform_3(%arg0: i32) -> (i32, i32) {
    %c0_i32 = arith.constant 0 : i32
    %c0_i32_0 = arith.constant 0 : i32
    %c0_i32_1 = arith.constant 0 : i32
    return %c0_i32, %c0_i32_0 : i32, i32
  }
  func.func @transform_4(%arg0: i32) -> (i32, i32) {
    %c0_i32 = arith.constant 0 : i32
    %c0_i32_0 = arith.constant 0 : i32
    %c0_i32_1 = arith.constant 0 : i32
    return %c0_i32, %c0_i32_0 : i32, i32
  }
  func.func @transform_5(%arg0: i32) -> (i32, i32) {
    %c0_i32 = arith.constant 0 : i32
    %c0_i32_0 = arith.constant 0 : i32
    %c0_i32_1 = arith.constant 0 : i32
    return %c0_i32, %c0_i32_0 : i32, i32
  }
  func.func @transform_6(%arg0: i32) -> (i32, i32) {
    %c0_i32 = arith.constant 0 : i32
    %c0_i32_0 = arith.constant 0 : i32
    %c0_i32_1 = arith.constant 0 : i32
    return %c0_i32, %c0_i32_0 : i32, i32
  }
  func.func @transform_7(%arg0: i32) -> (i32, i32) {
    %c0_i32 = arith.constant 0 : i32
    %c0_i32_0 = arith.constant 0 : i32
    %c0_i32_1 = arith.constant 0 : i32
    return %c0_i32, %c0_i32_0 : i32, i32
  }
  func.func @transform_8(%arg0: i32) -> (i32, i32) {
    %c0_i32 = arith.constant 0 : i32
    %c0_i32_0 = arith.constant 0 : i32
    %c0_i32_1 = arith.constant 0 : i32
    return %c0_i32, %c0_i32_0 : i32, i32
  }
  func.func @transform_9(%arg0: i32) -> (i32, i32) {
    %c0_i32 = arith.constant 0 : i32
    %c0_i32_0 = arith.constant 0 : i32
    %c0_i32_1 = arith.constant 0 : i32
    return %c0_i32, %c0_i32_0 : i32, i32
  }
  func.func @transform_10(%arg0: i32) -> (i32, i32) {
    %c0_i32 = arith.constant 0 : i32
    %c0_i32_0 = arith.constant 0 : i32
    %c0_i32_1 = arith.constant 0 : i32
    return %c0_i32, %c0_i32_0 : i32, i32
  }
  func.func @transform_11(%arg0: i32) -> (i32, i32) {
    %c0_i32 = arith.constant 0 : i32
    %c0_i32_0 = arith.constant 0 : i32
    return %arg0, %c0_i32 : i32, i32
  }
}

</mosaic_0001>

<llo_original>
// kernel: tpu_custom_call.1
$region0: #{tpu_custom_call.1}
  #allocation0 [shape = 'u32[]', space=smem, size = 0x4, offset = 0x4, fixed_abs, tag = 'smem constant byte address 0x4 - core index']
  #allocation1 [shape = 'u32[144,128]{1,0:T(1,128)}', space=vmem, size = 0x12000, scoped, tag = 'internal scratch']
  %s0 = inlined_call_operand.vmem [shape: f32[32,32], index: 0, kind: input, shape index: {}]
  %s1 = inlined_call_operand.vmem [shape: f32[64,32], index: 1, kind: input, shape index: {}]
  %s2 = inlined_call_operand.vmem [shape: f32[64,32], index: 2, kind: input, shape index: {}]
  %s3 = inlined_call_operand.vmem [shape: f32[32,16], index: 3, kind: input, shape index: {}]
  %s4 = inlined_call_operand.vmem [shape: f32[1,16], index: 4, kind: input, shape index: {}]
  %s5 = inlined_call_operand.vmem [shape: f32[32,16], index: 5, kind: input, shape index: {}]
  %s6 = inlined_call_operand.vmem [shape: f32[1,16], index: 6, kind: input, shape index: {}]
  %s7 = inlined_call_operand.vmem [shape: f32[32,16], index: 7, kind: input, shape index: {}]
  %s8 = inlined_call_operand.vmem [shape: f32[1,16], index: 8, kind: input, shape index: {}]
  %s9 = inlined_call_operand.vmem [shape: f32[16,32], index: 9, kind: input, shape index: {}]
  %s10 = inlined_call_operand.vmem [shape: f32[1,32], index: 10, kind: input, shape index: {}]
  %s11 = inlined_call_operand.hbm [shape: f32[32,32], index: 11, kind: output, shape index: {}]
  %s12 = sld [smem:[#allocation0]]
  $region77: #{tpu_custom_call.1} parent=0
    _
  %s14 = ssub.s32 1, %s12
  %s15 = scalar_select 0, %s14, %s12
  $region1: #{tpu_custom_call.1} parent=0
    #allocation2 [shape = 'u8[16384]{0}', space=vmem, size = 0x4000, scoped, tag = 'output window, operand 0']
    #allocation3 [shape = 's32[2]{0}', space=sflag, size = 0x8, scoped, tag = 'scoped memory for tpu_custom_call.1']
    %16 = vsyncpa [#allocation3], 0
    %s17 = scalar_lea.sflag [#allocation3], 1
    %18 = vsyncpa %s17, 0
    loop: start=0, step=1, limit=4
    $region2: #{tpu_custom_call.1} parent=1 // loop_pre_header
      _
    $region3: #{tpu_custom_call.1} parent=1 // loop_header
      %s20 = sphi 0, %s24
      %p21 = scmp.ge.s32.totalorder %s20, 4
      %s30 = sphi 0, %s32
      %s33 = sphi 0, %s30
      %s34 = sphi 0, %s33
      %s50 = sphi 0, %s34
      %s56 = sphi 0, %s58
      %s59 = sphi 0, %s56
      %s60 = sphi 0, %s59
      %s76 = sphi 0, %s60
      %s82 = sphi 0, %s84
      %s85 = sphi 0, %s82
      %s86 = sphi 0, %s85
      %s102 = sphi 0, %s86
      %s106 = sphi 0, %s106
      %s108 = sphi 0, %s106
      %s109 = sphi 0, %s108
      %s123 = sphi 0, %s109
      %s127 = sphi 0, %s127
      %s129 = sphi 0, %s127
      %s130 = sphi 0, %s129
      %s144 = sphi 0, %s130
      %s148 = sphi 0, %s148
      %s150 = sphi 0, %s148
      %s151 = sphi 0, %s150
      %s165 = sphi 0, %s151
      %s169 = sphi 0, %s169
      %s171 = sphi 0, %s169
      %s172 = sphi 0, %s171
      %s186 = sphi 0, %s172
      %s190 = sphi 0, %s190
      %s192 = sphi 0, %s190
      %s193 = sphi 0, %s192
      %s207 = sphi 0, %s193
      %s211 = sphi 0, %s211
      %s213 = sphi 0, %s211
      %s214 = sphi 0, %s213
      %s228 = sphi 0, %s214
      %s232 = sphi 0, %s232
      %s234 = sphi 0, %s232
      %s235 = sphi 0, %s234
      %s249 = sphi 0, %s235
      %s253 = sphi 0, %s253
      %s255 = sphi 0, %s253
      %s256 = sphi 0, %s255
      %s270 = sphi 0, %s256
      %s276 = sphi 0, %s278
      %s279 = sphi 0, %s276
      %s280 = sphi 0, %s279
      %s296 = sphi 0, %s280
    $region4: #{tpu_custom_call.1} parent=1 // loop_header_branch
      %23 = sbr.rel (%p21) target = $region8
    $region5: #{tpu_custom_call.1} parent=1 // loop_body
      %s25 = ssub.s32 %s20, 1
      %s26 = ssub.s32 %s20, 2
      %s27 = sadd.s32 %s20, 1
      %s28 = ssub.s32 %s20, %s27
      %p29 = scmp.eq.s32.totalorder %s28, 0
      %s31 = sadd.s32 %s30, 1
      %s32 = scalar_select %p29, %s30, %s31
      %p35 = pneg %p29
      %p36 = scmp.eq.s32.totalorder %s20, 1
      %p37 = por %p35, %p36
      %p38 = scmp.ne.s32.totalorder %s30, %s33
      %p39 = scmp.eq.s32.totalorder %s20, 0
      %p40 = por %p38, %p39
      %p41 = scmp.ne.s32.totalorder %s30, %s33
      %p42 = scmp.eq.s32.totalorder %s25, 1
      %p43 = por %p41, %p42
      %p44 = scmp.ne.s32.totalorder %s33, %s34
      %p45 = scmp.eq.s32.totalorder %s25, 0
      %p46 = por %p44, %p45
      %p47 = scmp.ne.s32.totalorder %s33, %s34
      %p48 = scmp.eq.s32.totalorder %s26, 1
      %p49 = por %p47, %p48
      %p51 = scmp.ne.s32.totalorder %s34, %s50
      %p52 = scmp.eq.s32.totalorder %s26, 0
      %p53 = por %p51, %p52
      %s54 = ssub.s32 %s20, %s27
      %p55 = scmp.eq.s32.totalorder %s54, 0
      %s57 = sadd.s32 %s56, 1
      %s58 = scalar_select %p55, %s56, %s57
      %p61 = pneg %p55
      %p62 = scmp.eq.s32.totalorder %s20, 1
      %p63 = por %p61, %p62
      %p64 = scmp.ne.s32.totalorder %s56, %s59
      %p65 = scmp.eq.s32.totalorder %s20, 0
      %p66 = por %p64, %p65
      %p67 = scmp.ne.s32.totalorder %s56, %s59
      %p68 = scmp.eq.s32.totalorder %s25, 1
      %p69 = por %p67, %p68
      %p70 = scmp.ne.s32.totalorder %s59, %s60
      %p71 = scmp.eq.s32.totalorder %s25, 0
      %p72 = por %p70, %p71
      %p73 = scmp.ne.s32.totalorder %s59, %s60
      %p74 = scmp.eq.s32.totalorder %s26, 1
      %p75 = por %p73, %p74
      %p77 = scmp.ne.s32.totalorder %s60, %s76
      %p78 = scmp.eq.s32.totalorder %s26, 0
      %p79 = por %p77, %p78
      %s80 = ssub.s32 %s20, %s27
      %p81 = scmp.eq.s32.totalorder %s80, 0
      %s83 = sadd.s32 %s82, 1
      %s84 = scalar_select %p81, %s82, %s83
      %p87 = pneg %p81
      %p88 = scmp.eq.s32.totalorder %s20, 1
      %p89 = por %p87, %p88
      %p90 = scmp.ne.s32.totalorder %s82, %s85
      %p91 = scmp.eq.s32.totalorder %s20, 0
      %p92 = por %p90, %p91
      %p93 = scmp.ne.s32.totalorder %s82, %s85
      %p94 = scmp.eq.s32.totalorder %s25, 1
      %p95 = por %p93, %p94
      %p96 = scmp.ne.s32.totalorder %s85, %s86
      %p97 = scmp.eq.s32.totalorder %s25, 0
      %p98 = por %p96, %p97
      %p99 = scmp.ne.s32.totalorder %s85, %s86
      %p100 = scmp.eq.s32.totalorder %s26, 1
      %p101 = por %p99, %p100
      %p103 = scmp.ne.s32.totalorder %s86, %s102
      %p104 = scmp.eq.s32.totalorder %s26, 0
      %p105 = por %p103, %p104
      %s107 = sadd.s32 %s106, 1
      %p110 = scmp.eq.s32.totalorder %s20, 1
      %p111 = scmp.ne.s32.totalorder %s106, %s108
      %p112 = scmp.eq.s32.totalorder %s20, 0
      %p113 = por %p111, %p112
      %p114 = scmp.ne.s32.totalorder %s106, %s108
      %p115 = scmp.eq.s32.totalorder %s25, 1
      %p116 = por %p114, %p115
      %p117 = scmp.ne.s32.totalorder %s108, %s109
      %p118 = scmp.eq.s32.totalorder %s25, 0
      %p119 = por %p117, %p118
      %p120 = scmp.ne.s32.totalorder %s108, %s109
      %p121 = scmp.eq.s32.totalorder %s26, 1
      %p122 = por %p120, %p121
      %p124 = scmp.ne.s32.totalorder %s109, %s123
      %p125 = scmp.eq.s32.totalorder %s26, 0
      %p126 = por %p124, %p125
      %s128 = sadd.s32 %s127, 1
      %p131 = scmp.eq.s32.totalorder %s20, 1
      %p132 = scmp.ne.s32.totalorder %s127, %s129
      %p133 = scmp.eq.s32.totalorder %s20, 0
      %p134 = por %p132, %p133
      %p135 = scmp.ne.s32.totalorder %s127, %s129
      %p136 = scmp.eq.s32.totalorder %s25, 1
      %p137 = por %p135, %p136
      %p138 = scmp.ne.s32.totalorder %s129, %s130
      %p139 = scmp.eq.s32.totalorder %s25, 0
      %p140 = por %p138, %p139
      %p141 = scmp.ne.s32.totalorder %s129, %s130
      %p142 = scmp.eq.s32.totalorder %s26, 1
      %p143 = por %p141, %p142
      %p145 = scmp.ne.s32.totalorder %s130, %s144
      %p146 = scmp.eq.s32.totalorder %s26, 0
      %p147 = por %p145, %p146
      %s149 = sadd.s32 %s148, 1
      %p152 = scmp.eq.s32.totalorder %s20, 1
      %p153 = scmp.ne.s32.totalorder %s148, %s150
      %p154 = scmp.eq.s32.totalorder %s20, 0
      %p155 = por %p153, %p154
      %p156 = scmp.ne.s32.totalorder %s148, %s150
      %p157 = scmp.eq.s32.totalorder %s25, 1
      %p158 = por %p156, %p157
      %p159 = scmp.ne.s32.totalorder %s150, %s151
      %p160 = scmp.eq.s32.totalorder %s25, 0
      %p161 = por %p159, %p160
      %p162 = scmp.ne.s32.totalorder %s150, %s151
      %p163 = scmp.eq.s32.totalorder %s26, 1
      %p164 = por %p162, %p163
      %p166 = scmp.ne.s32.totalorder %s151, %s165
      %p167 = scmp.eq.s32.totalorder %s26, 0
      %p168 = por %p166, %p167
      %s170 = sadd.s32 %s169, 1
      %p173 = scmp.eq.s32.totalorder %s20, 1
      %p174 = scmp.ne.s32.totalorder %s169, %s171
      %p175 = scmp.eq.s32.totalorder %s20, 0
      %p176 = por %p174, %p175
      %p177 = scmp.ne.s32.totalorder %s169, %s171
      %p178 = scmp.eq.s32.totalorder %s25, 1
      %p179 = por %p177, %p178
      %p180 = scmp.ne.s32.totalorder %s171, %s172
      %p181 = scmp.eq.s32.totalorder %s25, 0
      %p182 = por %p180, %p181
      %p183 = scmp.ne.s32.totalorder %s171, %s172
      %p184 = scmp.eq.s32.totalorder %s26, 1
      %p185 = por %p183, %p184
      %p187 = scmp.ne.s32.totalorder %s172, %s186
      %p188 = scmp.eq.s32.totalorder %s26, 0
      %p189 = por %p187, %p188
      %s191 = sadd.s32 %s190, 1
      %p194 = scmp.eq.s32.totalorder %s20, 1
      %p195 = scmp.ne.s32.totalorder %s190, %s192
      %p196 = scmp.eq.s32.totalorder %s20, 0
      %p197 = por %p195, %p196
      %p198 = scmp.ne.s32.totalorder %s190, %s192
      %p199 = scmp.eq.s32.totalorder %s25, 1
      %p200 = por %p198, %p199
      %p201 = scmp.ne.s32.totalorder %s192, %s193
      %p202 = scmp.eq.s32.totalorder %s25, 0
      %p203 = por %p201, %p202
      %p204 = scmp.ne.s32.totalorder %s192, %s193
      %p205 = scmp.eq.s32.totalorder %s26, 1
      %p206 = por %p204, %p205
      %p208 = scmp.ne.s32.totalorder %s193, %s207
      %p209 = scmp.eq.s32.totalorder %s26, 0
      %p210 = por %p208, %p209
      %s212 = sadd.s32 %s211, 1
      %p215 = scmp.eq.s32.totalorder %s20, 1
      %p216 = scmp.ne.s32.totalorder %s211, %s213
      %p217 = scmp.eq.s32.totalorder %s20, 0
      %p218 = por %p216, %p217
      %p219 = scmp.ne.s32.totalorder %s211, %s213
      %p220 = scmp.eq.s32.totalorder %s25, 1
      %p221 = por %p219, %p220
      %p222 = scmp.ne.s32.totalorder %s213, %s214
      %p223 = scmp.eq.s32.totalorder %s25, 0
      %p224 = por %p222, %p223
      %p225 = scmp.ne.s32.totalorder %s213, %s214
      %p226 = scmp.eq.s32.totalorder %s26, 1
      %p227 = por %p225, %p226
      %p229 = scmp.ne.s32.totalorder %s214, %s228
      %p230 = scmp.eq.s32.totalorder %s26, 0
      %p231 = por %p229, %p230
      %s233 = sadd.s32 %s232, 1
      %p236 = scmp.eq.s32.totalorder %s20, 1
      %p237 = scmp.ne.s32.totalorder %s232, %s234
      %p238 = scmp.eq.s32.totalorder %s20, 0
      %p239 = por %p237, %p238
      %p240 = scmp.ne.s32.totalorder %s232, %s234
      %p241 = scmp.eq.s32.totalorder %s25, 1
      %p242 = por %p240, %p241
      %p243 = scmp.ne.s32.totalorder %s234, %s235
      %p244 = scmp.eq.s32.totalorder %s25, 0
      %p245 = por %p243, %p244
      %p246 = scmp.ne.s32.totalorder %s234, %s235
      %p247 = scmp.eq.s32.totalorder %s26, 1
      %p248 = por %p246, %p247
      %p250 = scmp.ne.s32.totalorder %s235, %s249
      %p251 = scmp.eq.s32.totalorder %s26, 0
      %p252 = por %p250, %p251
      %s254 = sadd.s32 %s253, 1
      %p257 = scmp.eq.s32.totalorder %s20, 1
      %p258 = scmp.ne.s32.totalorder %s253, %s255
      %p259 = scmp.eq.s32.totalorder %s20, 0
      %p260 = por %p258, %p259
      %p261 = scmp.ne.s32.totalorder %s253, %s255
      %p262 = scmp.eq.s32.totalorder %s25, 1
      %p263 = por %p261, %p262
      %p264 = scmp.ne.s32.totalorder %s255, %s256
      %p265 = scmp.eq.s32.totalorder %s25, 0
      %p266 = por %p264, %p265
      %p267 = scmp.ne.s32.totalorder %s255, %s256
      %p268 = scmp.eq.s32.totalorder %s26, 1
      %p269 = por %p267, %p268
      %p271 = scmp.ne.s32.totalorder %s256, %s270
      %p272 = scmp.eq.s32.totalorder %s26, 0
      %p273 = por %p271, %p272
      %s274 = ssub.s32 %s20, %s27
      %p275 = scmp.eq.s32.totalorder %s274, 0
      %s277 = sadd.s32 %s276, 1
      %s278 = scalar_select %p275, %s276, %s277
      %p281 = pneg %p275
      %p282 = scmp.eq.s32.totalorder %s20, 1
      %p283 = por %p281, %p282
      %p284 = scmp.ne.s32.totalorder %s276, %s279
      %p285 = scmp.eq.s32.totalorder %s20, 0
      %p286 = por %p284, %p285
      %p287 = scmp.ne.s32.totalorder %s276, %s279
      %p288 = scmp.eq.s32.totalorder %s25, 1
      %p289 = por %p287, %p288
      %p290 = scmp.ne.s32.totalorder %s279, %s280
      %p291 = scmp.eq.s32.totalorder %s25, 0
      %p292 = por %p290, %p291
      %p293 = scmp.ne.s32.totalorder %s279, %s280
      %p294 = scmp.eq.s32.totalorder %s26, 1
      %p295 = por %p293, %p294
      %p297 = scmp.ne.s32.totalorder %s280, %s296
      %p298 = scmp.eq.s32.totalorder %s26, 0
      %p299 = por %p297, %p298
      %p300 = scmp.le.s32.totalorder 1, %s20
      %p301 = scmp.lt.s32.totalorder %s20, 3
      %p302 = pnand %p300, %p301
      %p303 = pneg %p302
      // Predicated region
      $region9: #{tpu_custom_call.1} parent=5 // pred_check
        _
      $region10: #{tpu_custom_call.1} parent=5 // pred_check_branch
        %305 = sbr.rel (%p302) target = $region12
      $region11: #{tpu_custom_call.1} parent=5 // pred_region
        %s306 = ssub.s32 %s20, 1
        // Predicated region
        $region13: #{tpu_custom_call.1} parent=11 // pred_check
          %p307 = pneg %p119
        $region14: #{tpu_custom_call.1} parent=11 // pred_check_branch
          %309 = sbr.rel (%p307) target = $region16
        $region15: #{tpu_custom_call.1} parent=11 // pred_region
          _
        $region16: #{tpu_custom_call.1} parent=11 // pred_fallthru
          _
        // Predicated region
        $region17: #{tpu_custom_call.1} parent=11 // pred_check
          %p310 = pneg %p140
        $region18: #{tpu_custom_call.1} parent=11 // pred_check_branch
          %312 = sbr.rel (%p310) target = $region20
        $region19: #{tpu_custom_call.1} parent=11 // pred_region
          _
        $region20: #{tpu_custom_call.1} parent=11 // pred_fallthru
          _
        // Predicated region
        $region21: #{tpu_custom_call.1} parent=11 // pred_check
          %p313 = pneg %p161
        $region22: #{tpu_custom_call.1} parent=11 // pred_check_branch
          %315 = sbr.rel (%p313) target = $region24
        $region23: #{tpu_custom_call.1} parent=11 // pred_region
          _
        $region24: #{tpu_custom_call.1} parent=11 // pred_fallthru
          _
        // Predicated region
        $region25: #{tpu_custom_call.1} parent=11 // pred_check
          %p316 = pneg %p182
        $region26: #{tpu_custom_call.1} parent=11 // pred_check_branch
          %318 = sbr.rel (%p316) target = $region28
        $region27: #{tpu_custom_call.1} parent=11 // pred_region
          _
        $region28: #{tpu_custom_call.1} parent=11 // pred_fallthru
          _
        // Predicated region
        $region29: #{tpu_custom_call.1} parent=11 // pred_check
          %p319 = pneg %p203
        $region30: #{tpu_custom_call.1} parent=11 // pred_check_branch
          %321 = sbr.rel (%p319) target = $region32
        $region31: #{tpu_custom_call.1} parent=11 // pred_region
          _
        $region32: #{tpu_custom_call.1} parent=11 // pred_fallthru
          _
        // Predicated region
        $region33: #{tpu_custom_call.1} parent=11 // pred_check
          %p322 = pneg %p224
        $region34: #{tpu_custom_call.1} parent=11 // pred_check_branch
          %324 = sbr.rel (%p322) target = $region36
        $region35: #{tpu_custom_call.1} parent=11 // pred_region
          _
        $region36: #{tpu_custom_call.1} parent=11 // pred_fallthru
          _
        // Predicated region
        $region37: #{tpu_custom_call.1} parent=11 // pred_check
          %p325 = pneg %p245
        $region38: #{tpu_custom_call.1} parent=11 // pred_check_branch
          %327 = sbr.rel (%p325) target = $region40
        $region39: #{tpu_custom_call.1} parent=11 // pred_region
          _
        $region40: #{tpu_custom_call.1} parent=11 // pred_fallthru
          _
        // Predicated region
        $region41: #{tpu_custom_call.1} parent=11 // pred_check
          %p328 = pneg %p266
        $region42: #{tpu_custom_call.1} parent=11 // pred_check_branch
          %330 = sbr.rel (%p328) target = $region44
        $region43: #{tpu_custom_call.1} parent=11 // pred_region
          _
        $region44: #{tpu_custom_call.1} parent=11 // pred_fallthru
          _
      $region12: #{tpu_custom_call.1} parent=5 // pred_fallthru
        _
      %p331 = scmp.lt.s32.totalorder %s20, 2
      // Predicated region
      $region45: #{tpu_custom_call.1} parent=5 // pred_check
        %p332 = pneg %p331
      $region46: #{tpu_custom_call.1} parent=5 // pred_check_branch
        %334 = sbr.rel (%p332) target = $region48
      $region47: #{tpu_custom_call.1} parent=5 // pred_region
        // Predicated region
        $region49: #{tpu_custom_call.1} parent=47 // pred_check
          %p335 = pneg %p40
        $region50: #{tpu_custom_call.1} parent=47 // pred_check_branch
          %337 = sbr.rel (%p335) target = $region52
        $region51: #{tpu_custom_call.1} parent=47 // pred_region
          %s338 = smul.u32 2, %s20
          %p339 = scmp.lt.s32.totalorder %s338, 3
          %s340 = scalar_select %p339, %s338, 3
          %s341 = smul.addr %s340, 8
          %s342 = scalar_lea.vmem %s0, %s341
          %s343 = smul.u32 2, %s20
        $region52: #{tpu_custom_call.1} parent=47 // pred_fallthru
          _
        // Predicated region
        $region53: #{tpu_custom_call.1} parent=47 // pred_check
          %p344 = pneg %p66
        $region54: #{tpu_custom_call.1} parent=47 // pred_check_branch
          %346 = sbr.rel (%p344) target = $region56
        $region55: #{tpu_custom_call.1} parent=47 // pred_region
          %s347 = smul.u32 4, %s20
          %p348 = scmp.lt.s32.totalorder %s347, 7
          %s349 = scalar_select %p348, %s347, 7
          %s350 = smul.addr %s349, 8
          %s351 = scalar_lea.vmem %s1, %s350
          %s352 = smul.u32 4, %s20
        $region56: #{tpu_custom_call.1} parent=47 // pred_fallthru
          _
        // Predicated region
        $region57: #{tpu_custom_call.1} parent=47 // pred_check
          %p353 = pneg %p92
        $region58: #{tpu_custom_call.1} parent=47 // pred_check_branch
          %355 = sbr.rel (%p353) target = $region60
        $region59: #{tpu_custom_call.1} parent=47 // pred_region
          %s356 = smul.u32 4, %s20
          %p357 = scmp.lt.s32.totalorder %s356, 7
          %s358 = scalar_select %p357, %s356, 7
          %s359 = smul.addr %s358, 8
          %s360 = scalar_lea.vmem %s2, %s359
          %s361 = smul.u32 4, %s20
        $region60: #{tpu_custom_call.1} parent=47 // pred_fallthru
          _
      $region48: #{tpu_custom_call.1} parent=5 // pred_fallthru
        _
      %p362 = scmp.le.s32.totalorder 1, %s20
      %p363 = scmp.lt.s32.totalorder %s20, 3
      %p364 = pnand %p362, %p363
      %p365 = pneg %p364
      // Predicated region
      $region61: #{tpu_custom_call.1} parent=5 // pred_check
        _
      $region62: #{tpu_custom_call.1} parent=5 // pred_check_branch
        %367 = sbr.rel (%p364) target = $region64
      $region63: #{tpu_custom_call.1} parent=5 // pred_region
        %s368 = ssub.s32 %s20, 1
        %s369 = smul.u32 2, %s25
        %p370 = scmp.lt.s32.totalorder %s369, 3
        %s371 = scalar_select %p370, %s369, 3
        %s372 = smul.addr %s371, 8
        %s373 = scalar_lea.vmem %s0, %s372
        %p374 = pneg %p46
        %p375 = pneg %p43
        %s376 = smul.u32 4, %s25
        %p377 = scmp.lt.s32.totalorder %s376, 7
        %s378 = scalar_select %p377, %s376, 7
        %s379 = smul.addr %s378, 8
        %s380 = scalar_lea.vmem %s1, %s379
        %p381 = pneg %p72
        %p382 = pneg %p69
        %s383 = smul.u32 4, %s25
        %p384 = scmp.lt.s32.totalorder %s383, 7
        %s385 = scalar_select %p384, %s383, 7
        %s386 = smul.addr %s385, 8
        %s387 = scalar_lea.vmem %s2, %s386
        %p388 = pneg %p98
        %p389 = pneg %p95
        %p390 = pneg %p119
        %p391 = pneg %p116
        %p392 = pneg %p140
        %p393 = pneg %p137
        %p394 = pneg %p161
        %p395 = pneg %p158
        %p396 = pneg %p182
        %p397 = pneg %p179
        %p398 = pneg %p203
        %p399 = pneg %p200
        %p400 = pneg %p224
        %p401 = pneg %p221
        %p402 = pneg %p245
        %p403 = pneg %p242
        %p404 = pneg %p266
        %p405 = pneg %p263
        %p406 = pneg %p292
        %p407 = pneg %p289
        %s408 = sand.u32 %s279, 1
        %s409 = scalar_lea.sflag [#allocation3], %s408
        %s410 = sand.u32 %s279, 1
        %s411 = smul.addr %s410, 16
        %s412 = scalar_lea.vmem [#allocation2], %s411
        %s413 = smul.u32 2, %s25
        %p414 = scmp.lt.s32.totalorder %s413, 3
        %s415 = scalar_select %p414, %s413, 3
        %s416 = smul.addr %s415, 8
        %s417 = scalar_lea.vmem %s0, %s416
        %s418 = smul.u32 2, %s25
        %s419 = smul.u32 4, %s25
        %p420 = scmp.lt.s32.totalorder %s419, 7
        %s421 = scalar_select %p420, %s419, 7
        %s422 = smul.addr %s421, 8
        %s423 = scalar_lea.vmem %s1, %s422
        %s424 = smul.u32 4, %s25
        %s425 = smul.u32 4, %s25
        %p426 = scmp.lt.s32.totalorder %s425, 7
        %s427 = scalar_select %p426, %s425, 7
        %s428 = smul.addr %s427, 8
        %s429 = scalar_lea.vmem %s2, %s428
        %s430 = smul.u32 4, %s25
        %s431 = smul.u32 2, %s25
        %v432 = vld [vmem:[%s417] sm:$0xff]
        %v433 = vld [vmem:[%s417 + $0x8] sm:$0xff]
        %v434 = vld [vmem:[%s3] sm:$0xff]
        %v435 = vld [vmem:[%s3 + $0x8] sm:$0xff]
        %v436 = vld [vmem:[%s3 + $0x10] sm:$0xff]
        %v437 = vld [vmem:[%s3 + $0x18] sm:$0xff]
        %v438 = vld [vmem:[%s4] sm:$0x1]
        %v440 = vlaneseq
        %v441 = vshrl.u32 %v440, 7
        %v442 = vsub.s32 0, %v441
        %v443 = vrot.slane %v438, %v442
        %vm445 = vcmask 261120
        %v447 = vsel %vm445, %v432, 0
        %v450 = vsel %vm445, %v433, 0
        %452 = vmatprep.subr.mxu0 0.0
        %453 = vmatpush1.msra.mxu0 %v434
        %454 = vmatprep.subr.mxu0 0.0
        %455 = vmatpush1.msra.mxu0 %v435
        %456 = vmatprep.subr.mxu0 0.0
        %457 = vmatpush1.msra.mxu0 %v436
        %458 = vmatprep.subr.mxu0 0.0
        %459 = vmatpush1.msra.mxu0 %v437
        %460 = vmatprep.subr.mxu0 0.0
        %461 = vmatpush1.msra.mxu0 0.0
        %462 = vmatprep.subr.mxu0 0.0
        %463 = vmatpush1.msra.mxu0 0.0
        %464 = vmatprep.subr.mxu0 0.0
        %465 = vmatpush1.msra.mxu0 0.0
        %466 = vmatprep.subr.mxu0 0.0
        %467 = vmatpush1.msra.mxu0 0.0
        %468 = vmatprep.subr.mxu0 0.0
        %469 = vmatpush1.msra.mxu0 0.0
        %470 = vmatprep.subr.mxu0 0.0
        %471 = vmatpush1.msra.mxu0 0.0
        %472 = vmatprep.subr.mxu0 0.0
        %473 = vmatpush1.msra.mxu0 0.0
        %474 = vmatprep.subr.mxu0 0.0
        %475 = vmatpush1.msra.mxu0 0.0
        %476 = vmatprep.subr.mxu0 0.0
        %477 = vmatpush1.msra.mxu0 0.0
        %478 = vmatprep.subr.mxu0 0.0
        %479 = vmatpush1.msra.mxu0 0.0
        %480 = vmatprep.subr.mxu0 0.0
        %481 = vmatpush1.msra.mxu0 0.0
        %482 = vmatprep.subr.mxu0 0.0
        %483 = vmatpush1.msra.mxu0 0.0
        %484 = vmatprep.subr.mxu0 0.0
        %485 = vmatpush1.msra.mxu0 0.0
        %486 = vmatprep.subr.mxu0 0.0
        %487 = vmatpush1.msra.mxu0 0.0
        %488 = vmatprep.subr.mxu0 0.0
        %489 = vmatpush1.msra.mxu0 0.0
        %490 = vmatprep.subr.mxu0 0.0
        %491 = vmatpush1.msra.mxu0 0.0
        %492 = vmatprep.subr.mxu0 0.0
        %493 = vmatpush1.msra.mxu0 0.0
        %494 = vmatprep.subr.mxu0 0.0
        %495 = vmatpush1.msra.mxu0 0.0
        %496 = vmatprep.subr.mxu0 0.0
        %497 = vmatpush1.msra.mxu0 0.0
        %498 = vmatprep.subr.mxu0 0.0
        %499 = vmatpush1.msra.mxu0 0.0
        %500 = vmatprep.subr.mxu0 0.0
        %501 = vmatpush1.msra.mxu0 0.0
        %502 = vmatprep.subr.mxu0 0.0
        %503 = vmatpush1.msra.mxu0 0.0
        %504 = vmatprep.subr.mxu0 0.0
        %505 = vmatpush1.msra.mxu0 0.0
        %506 = vmatprep.subr.mxu0 0.0
        %507 = vmatpush1.msra.mxu0 0.0
        %508 = vmatprep.subr.mxu0 0.0
        %509 = vmatpush1.msra.mxu0 0.0
        %510 = vmatprep.subr.mxu0 0.0
        %511 = vmatpush1.msra.mxu0 0.0
        %512 = vmatprep.subr.mxu0 0.0
        %513 = vmatpush1.msra.mxu0 0.0
        %514 = vmatprep.subr.mxu0 0.0
        %515 = vmatpush1.msra.mxu0 0.0
        %516 = vmatprep.mubr.f32.mxu0 0.0
        %517 = vmatmul.mubr.f32.gmra.mrb[0].mxu0 %v447
        %v518 = vpop.f32.mrb[0].mxu0
        %v519 = vadd.f32 %v443, %v518
        %v520 = vpop.f32.mrb[0].mxu0
        %521 = vmatprep.mubr.f32.mxu0 0.0
        %522 = vmatmul.mubr.f32.gmra.mrb[0].mxu0 %v450
        %v523 = vpop.f32.mrb[0].mxu0
        %v524 = vadd.f32 %v443, %v523
        %v525 = vpop.f32.mrb[0].mxu0
        %526 = vdwg.mxu0
        %v527 = vld [vmem:[%s423] sm:$0xff]
        %v528 = vld [vmem:[%s423 + $0x8] sm:$0xff]
        %v529 = vld [vmem:[%s423 + $0x10] sm:$0xff]
        %v530 = vld [vmem:[%s423 + $0x18] sm:$0xff]
        %v531 = vld [vmem:[%s5] sm:$0xff]
        %v532 = vld [vmem:[%s5 + $0x8] sm:$0xff]
        %v533 = vld [vmem:[%s5 + $0x10] sm:$0xff]
        %v534 = vld [vmem:[%s5 + $0x18] sm:$0xff]
        %v535 = vld [vmem:[%s6] sm:$0x1]
        %v537 = vlaneseq
        %v538 = vshrl.u32 %v537, 7
        %v539 = vsub.s32 0, %v538
        %v540 = vrot.slane %v535, %v539
        %v543 = vsel %vm445, %v527, 0
        %v546 = vsel %vm445, %v528, 0
        %v549 = vsel %vm445, %v529, 0
        %v552 = vsel %vm445, %v530, 0
        %554 = vmatprep.subr.mxu0 0.0
        %555 = vmatpush1.msra.mxu0 %v531
        %556 = vmatprep.subr.mxu0 0.0
        %557 = vmatpush1.msra.mxu0 %v532
        %558 = vmatprep.subr.mxu0 0.0
        %559 = vmatpush1.msra.mxu0 %v533
        %560 = vmatprep.subr.mxu0 0.0
        %561 = vmatpush1.msra.mxu0 %v534
        %562 = vmatprep.subr.mxu0 0.0
        %563 = vmatpush1.msra.mxu0 0.0
        %564 = vmatprep.subr.mxu0 0.0
        %565 = vmatpush1.msra.mxu0 0.0
        %566 = vmatprep.subr.mxu0 0.0
        %567 = vmatpush1.msra.mxu0 0.0
        %568 = vmatprep.subr.mxu0 0.0
        %569 = vmatpush1.msra.mxu0 0.0
        %570 = vmatprep.subr.mxu0 0.0
        %571 = vmatpush1.msra.mxu0 0.0
        %572 = vmatprep.subr.mxu0 0.0
        %573 = vmatpush1.msra.mxu0 0.0
        %574 = vmatprep.subr.mxu0 0.0
        %575 = vmatpush1.msra.mxu0 0.0
        %576 = vmatprep.subr.mxu0 0.0
        %577 = vmatpush1.msra.mxu0 0.0
        %578 = vmatprep.subr.mxu0 0.0
        %579 = vmatpush1.msra.mxu0 0.0
        %580 = vmatprep.subr.mxu0 0.0
        %581 = vmatpush1.msra.mxu0 0.0
        %582 = vmatprep.subr.mxu0 0.0
        %583 = vmatpush1.msra.mxu0 0.0
        %584 = vmatprep.subr.mxu0 0.0
        %585 = vmatpush1.msra.mxu0 0.0
        %586 = vmatprep.subr.mxu0 0.0
        %587 = vmatpush1.msra.mxu0 0.0
        %588 = vmatprep.subr.mxu0 0.0
        %589 = vmatpush1.msra.mxu0 0.0
        %590 = vmatprep.subr.mxu0 0.0
        %591 = vmatpush1.msra.mxu0 0.0
        %592 = vmatprep.subr.mxu0 0.0
        %593 = vmatpush1.msra.mxu0 0.0
        %594 = vmatprep.subr.mxu0 0.0
        %595 = vmatpush1.msra.mxu0 0.0
        %596 = vmatprep.subr.mxu0 0.0
        %597 = vmatpush1.msra.mxu0 0.0
        %598 = vmatprep.subr.mxu0 0.0
        %599 = vmatpush1.msra.mxu0 0.0
        %600 = vmatprep.subr.mxu0 0.0
        %601 = vmatpush1.msra.mxu0 0.0
        %602 = vmatprep.subr.mxu0 0.0
        %603 = vmatpush1.msra.mxu0 0.0
        %604 = vmatprep.subr.mxu0 0.0
        %605 = vmatpush1.msra.mxu0 0.0
        %606 = vmatprep.subr.mxu0 0.0
        %607 = vmatpush1.msra.mxu0 0.0
        %608 = vmatprep.subr.mxu0 0.0
        %609 = vmatpush1.msra.mxu0 0.0
        %610 = vmatprep.subr.mxu0 0.0
        %611 = vmatpush1.msra.mxu0 0.0
        %612 = vmatprep.subr.mxu0 0.0
        %613 = vmatpush1.msra.mxu0 0.0
        %614 = vmatprep.subr.mxu0 0.0
        %615 = vmatpush1.msra.mxu0 0.0
        %616 = vmatprep.subr.mxu0 0.0
        %617 = vmatpush1.msra.mxu0 0.0
        %618 = vmatprep.mubr.f32.mxu0 0.0
        %619 = vmatmul.mubr.f32.gmra.mrb[0].mxu0 %v543
        %v620 = vpop.f32.mrb[0].mxu0
        %v621 = vadd.f32 %v540, %v620
        %v622 = vpop.f32.mrb[0].mxu0
        %623 = vmatprep.mubr.f32.mxu0 0.0
        %624 = vmatmul.mubr.f32.gmra.mrb[0].mxu0 %v546
        %v625 = vpop.f32.mrb[0].mxu0
        %v626 = vadd.f32 %v540, %v625
        %v627 = vpop.f32.mrb[0].mxu0
        %628 = vmatprep.mubr.f32.mxu0 0.0
        %629 = vmatmul.mubr.f32.gmra.mrb[0].mxu0 %v549
        %v630 = vpop.f32.mrb[0].mxu0
        %v631 = vadd.f32 %v540, %v630
        %v632 = vpop.f32.mrb[0].mxu0
        %633 = vmatprep.mubr.f32.mxu0 0.0
        %634 = vmatmul.mubr.f32.gmra.mrb[0].mxu0 %v552
        %v635 = vpop.f32.mrb[0].mxu0
        %v636 = vadd.f32 %v540, %v635
        %v637 = vpop.f32.mrb[0].mxu0
        %638 = vdwg.mxu0
        %v639 = vld [vmem:[%s429] sm:$0xff]
        %v640 = vld [vmem:[%s429 + $0x8] sm:$0xff]
        %v641 = vld [vmem:[%s429 + $0x10] sm:$0xff]
        %v642 = vld [vmem:[%s429 + $0x18] sm:$0xff]
        %v643 = vld [vmem:[%s7] sm:$0xff]
        %v644 = vld [vmem:[%s7 + $0x8] sm:$0xff]
        %v645 = vld [vmem:[%s7 + $0x10] sm:$0xff]
        %v646 = vld [vmem:[%s7 + $0x18] sm:$0xff]
        %v647 = vld [vmem:[%s8] sm:$0x1]
        %v649 = vlaneseq
        %v650 = vshrl.u32 %v649, 7
        %v651 = vsub.s32 0, %v650
        %v652 = vrot.slane %v647, %v651
        %v655 = vsel %vm445, %v639, 0
        %v658 = vsel %vm445, %v640, 0
        %v661 = vsel %vm445, %v641, 0
        %v664 = vsel %vm445, %v642, 0
        %666 = vmatprep.subr.mxu0 0.0
        %667 = vmatpush1.msra.mxu0 %v643
        %668 = vmatprep.subr.mxu0 0.0
        %669 = vmatpush1.msra.mxu0 %v644
        %670 = vmatprep.subr.mxu0 0.0
        %671 = vmatpush1.msra.mxu0 %v645
        %672 = vmatprep.subr.mxu0 0.0
        %673 = vmatpush1.msra.mxu0 %v646
        %674 = vmatprep.subr.mxu0 0.0
        %675 = vmatpush1.msra.mxu0 0.0
        %676 = vmatprep.subr.mxu0 0.0
        %677 = vmatpush1.msra.mxu0 0.0
        %678 = vmatprep.subr.mxu0 0.0
        %679 = vmatpush1.msra.mxu0 0.0
        %680 = vmatprep.subr.mxu0 0.0
        %681 = vmatpush1.msra.mxu0 0.0
        %682 = vmatprep.subr.mxu0 0.0
        %683 = vmatpush1.msra.mxu0 0.0
        %684 = vmatprep.subr.mxu0 0.0
        %685 = vmatpush1.msra.mxu0 0.0
        %686 = vmatprep.subr.mxu0 0.0
        %687 = vmatpush1.msra.mxu0 0.0
        %688 = vmatprep.subr.mxu0 0.0
        %689 = vmatpush1.msra.mxu0 0.0
        %690 = vmatprep.subr.mxu0 0.0
        %691 = vmatpush1.msra.mxu0 0.0
        %692 = vmatprep.subr.mxu0 0.0
        %693 = vmatpush1.msra.mxu0 0.0
        %694 = vmatprep.subr.mxu0 0.0
        %695 = vmatpush1.msra.mxu0 0.0
        %696 = vmatprep.subr.mxu0 0.0
        %697 = vmatpush1.msra.mxu0 0.0
        %698 = vmatprep.subr.mxu0 0.0
        %699 = vmatpush1.msra.mxu0 0.0
        %700 = vmatprep.subr.mxu0 0.0
        %701 = vmatpush1.msra.mxu0 0.0
        %702 = vmatprep.subr.mxu0 0.0
        %703 = vmatpush1.msra.mxu0 0.0
        %704 = vmatprep.subr.mxu0 0.0
        %705 = vmatpush1.msra.mxu0 0.0
        %706 = vmatprep.subr.mxu0 0.0
        %707 = vmatpush1.msra.mxu0 0.0
        %708 = vmatprep.subr.mxu0 0.0
        %709 = vmatpush1.msra.mxu0 0.0
        %710 = vmatprep.subr.mxu0 0.0
        %711 = vmatpush1.msra.mxu0 0.0
        %712 = vmatprep.subr.mxu0 0.0
        %713 = vmatpush1.msra.mxu0 0.0
        %714 = vmatprep.subr.mxu0 0.0
        %715 = vmatpush1.msra.mxu0 0.0
        %716 = vmatprep.subr.mxu0 0.0
        %717 = vmatpush1.msra.mxu0 0.0
        %718 = vmatprep.subr.mxu0 0.0
        %719 = vmatpush1.msra.mxu0 0.0
        %720 = vmatprep.subr.mxu0 0.0
        %721 = vmatpush1.msra.mxu0 0.0
        %722 = vmatprep.subr.mxu0 0.0
        %723 = vmatpush1.msra.mxu0 0.0
        %724 = vmatprep.subr.mxu0 0.0
        %725 = vmatpush1.msra.mxu0 0.0
        %726 = vmatprep.subr.mxu0 0.0
        %727 = vmatpush1.msra.mxu0 0.0
        %728 = vmatprep.subr.mxu0 0.0
        %729 = vmatpush1.msra.mxu0 0.0
        %730 = vmatprep.mubr.f32.mxu0 0.0
        %731 = vmatmul.mubr.f32.gmra.mrb[0].mxu0 %v655
        %v732 = vpop.f32.mrb[0].mxu0
        %v733 = vadd.f32 %v652, %v732
        %v734 = vpop.f32.mrb[0].mxu0
        %735 = vmatprep.mubr.f32.mxu0 0.0
        %736 = vmatmul.mubr.f32.gmra.mrb[0].mxu0 %v658
        %v737 = vpop.f32.mrb[0].mxu0
        %v738 = vadd.f32 %v652, %v737
        %v739 = vpop.f32.mrb[0].mxu0
        %740 = vmatprep.mubr.f32.mxu0 0.0
        %741 = vmatmul.mubr.f32.gmra.mrb[0].mxu0 %v661
        %v742 = vpop.f32.mrb[0].mxu0
        %v743 = vadd.f32 %v652, %v742
        %v744 = vpop.f32.mrb[0].mxu0
        %745 = vmatprep.mubr.f32.mxu0 0.0
        %746 = vmatmul.mubr.f32.gmra.mrb[0].mxu0 %v664
        %v747 = vpop.f32.mrb[0].mxu0
        %v748 = vadd.f32 %v652, %v747
        %v749 = vpop.f32.mrb[0].mxu0
        %750 = vdwg.mxu0
        %vm751 = vcmask 64512
        %v753 = vsel %vm751, %v519, 0
        %v756 = vsel %vm751, %v621, 0
        %v759 = vsel %vm751, %v626, 0
        %761 = vmatprep.subr.mxu0 0.0
        %762 = vmatpush1.xpose.msra.mxu0 %v756
        %763 = vmatprep.subr.mxu0 0.0
        %764 = vmatpush1.xpose.msra.mxu0 %v759
        %765 = vmatprep.subr.mxu0 0.0
        %766 = vmatpush1.xpose.msra.mxu0 0.0
        %767 = vmatprep.subr.mxu0 0.0
        %768 = vmatpush1.xpose.msra.mxu0 0.0
        %769 = vmatprep.subr.mxu0 0.0
        %770 = vmatpush1.xpose.msra.mxu0 0.0
        %771 = vmatprep.subr.mxu0 0.0
        %772 = vmatpush1.xpose.msra.mxu0 0.0
        %773 = vmatprep.subr.mxu0 0.0
        %774 = vmatpush1.xpose.msra.mxu0 0.0
        %775 = vmatprep.subr.mxu0 0.0
        %776 = vmatpush1.xpose.msra.mxu0 0.0
        %777 = vmatprep.subr.mxu0 0.0
        %778 = vmatpush1.xpose.msra.mxu0 0.0
        %779 = vmatprep.subr.mxu0 0.0
        %780 = vmatpush1.xpose.msra.mxu0 0.0
        %781 = vmatprep.subr.mxu0 0.0
        %782 = vmatpush1.xpose.msra.mxu0 0.0
        %783 = vmatprep.subr.mxu0 0.0
        %784 = vmatpush1.xpose.msra.mxu0 0.0
        %785 = vmatprep.subr.mxu0 0.0
        %786 = vmatpush1.xpose.msra.mxu0 0.0
        %787 = vmatprep.subr.mxu0 0.0
        %788 = vmatpush1.xpose.msra.mxu0 0.0
        %789 = vmatprep.subr.mxu0 0.0
        %790 = vmatpush1.xpose.msra.mxu0 0.0
        %791 = vmatprep.subr.mxu0 0.0
        %792 = vmatpush1.xpose.msra.mxu0 0.0
        %793 = vmatprep.subr.mxu0 0.0
        %794 = vmatpush1.xpose.msra.mxu0 0.0
        %795 = vmatprep.subr.mxu0 0.0
        %796 = vmatpush1.xpose.msra.mxu0 0.0
        %797 = vmatprep.subr.mxu0 0.0
        %798 = vmatpush1.xpose.msra.mxu0 0.0
        %799 = vmatprep.subr.mxu0 0.0
        %800 = vmatpush1.xpose.msra.mxu0 0.0
        %801 = vmatprep.subr.mxu0 0.0
        %802 = vmatpush1.xpose.msra.mxu0 0.0
        %803 = vmatprep.subr.mxu0 0.0
        %804 = vmatpush1.xpose.msra.mxu0 0.0
        %805 = vmatprep.subr.mxu0 0.0
        %806 = vmatpush1.xpose.msra.mxu0 0.0
        %807 = vmatprep.subr.mxu0 0.0
        %808 = vmatpush1.xpose.msra.mxu0 0.0
        %809 = vmatprep.subr.mxu0 0.0
        %810 = vmatpush1.xpose.msra.mxu0 0.0
        %811 = vmatprep.subr.mxu0 0.0
        %812 = vmatpush1.xpose.msra.mxu0 0.0
        %813 = vmatprep.subr.mxu0 0.0
        %814 = vmatpush1.xpose.msra.mxu0 0.0
        %815 = vmatprep.subr.mxu0 0.0
        %816 = vmatpush1.xpose.msra.mxu0 0.0
        %817 = vmatprep.subr.mxu0 0.0
        %818 = vmatpush1.xpose.msra.mxu0 0.0
        %819 = vmatprep.subr.mxu0 0.0
        %820 = vmatpush1.xpose.msra.mxu0 0.0
        %821 = vmatprep.subr.mxu0 0.0
        %822 = vmatpush1.xpose.msra.mxu0 0.0
        %823 = vmatprep.subr.mxu0 0.0
        %824 = vmatpush1.xpose.msra.mxu0 0.0
        %825 = vmatprep.mubr.f32.mxu0 0.0
        %826 = vmatmul.mubr.f32.gmra.mrb[0].mxu0 %v753
        %v827 = vpop.f32.mrb[0].mxu0
        %v828 = vadd.f32 0.0, %v827
        %v829 = vpop.f32.mrb[0].mxu0
        %830 = vdwg.mxu0
        %v832 = vsel %vm751, %v524, 0
        %v835 = vsel %vm751, %v631, 0
        %v838 = vsel %vm751, %v636, 0
        %840 = vmatprep.subr.mxu0 0.0
        %841 = vmatpush1.xpose.msra.mxu0 %v835
        %842 = vmatprep.subr.mxu0 0.0
        %843 = vmatpush1.xpose.msra.mxu0 %v838
        %844 = vmatprep.subr.mxu0 0.0
        %845 = vmatpush1.xpose.msra.mxu0 0.0
        %846 = vmatprep.subr.mxu0 0.0
        %847 = vmatpush1.xpose.msra.mxu0 0.0
        %848 = vmatprep.subr.mxu0 0.0
        %849 = vmatpush1.xpose.msra.mxu0 0.0
        %850 = vmatprep.subr.mxu0 0.0
        %851 = vmatpush1.xpose.msra.mxu0 0.0
        %852 = vmatprep.subr.mxu0 0.0
        %853 = vmatpush1.xpose.msra.mxu0 0.0
        %854 = vmatprep.subr.mxu0 0.0
        %855 = vmatpush1.xpose.msra.mxu0 0.0
        %856 = vmatprep.subr.mxu0 0.0
        %857 = vmatpush1.xpose.msra.mxu0 0.0
        %858 = vmatprep.subr.mxu0 0.0
        %859 = vmatpush1.xpose.msra.mxu0 0.0
        %860 = vmatprep.subr.mxu0 0.0
        %861 = vmatpush1.xpose.msra.mxu0 0.0
        %862 = vmatprep.subr.mxu0 0.0
        %863 = vmatpush1.xpose.msra.mxu0 0.0
        %864 = vmatprep.subr.mxu0 0.0
        %865 = vmatpush1.xpose.msra.mxu0 0.0
        %866 = vmatprep.subr.mxu0 0.0
        %867 = vmatpush1.xpose.msra.mxu0 0.0
        %868 = vmatprep.subr.mxu0 0.0
        %869 = vmatpush1.xpose.msra.mxu0 0.0
        %870 = vmatprep.subr.mxu0 0.0
        %871 = vmatpush1.xpose.msra.mxu0 0.0
        %872 = vmatprep.subr.mxu0 0.0
        %873 = vmatpush1.xpose.msra.mxu0 0.0
        %874 = vmatprep.subr.mxu0 0.0
        %875 = vmatpush1.xpose.msra.mxu0 0.0
        %876 = vmatprep.subr.mxu0 0.0
        %877 = vmatpush1.xpose.msra.mxu0 0.0
        %878 = vmatprep.subr.mxu0 0.0
        %879 = vmatpush1.xpose.msra.mxu0 0.0
        %880 = vmatprep.subr.mxu0 0.0
        %881 = vmatpush1.xpose.msra.mxu0 0.0
        %882 = vmatprep.subr.mxu0 0.0
        %883 = vmatpush1.xpose.msra.mxu0 0.0
        %884 = vmatprep.subr.mxu0 0.0
        %885 = vmatpush1.xpose.msra.mxu0 0.0
        %886 = vmatprep.subr.mxu0 0.0
        %887 = vmatpush1.xpose.msra.mxu0 0.0
        %888 = vmatprep.subr.mxu0 0.0
        %889 = vmatpush1.xpose.msra.mxu0 0.0
        %890 = vmatprep.subr.mxu0 0.0
        %891 = vmatpush1.xpose.msra.mxu0 0.0
        %892 = vmatprep.subr.mxu0 0.0
        %893 = vmatpush1.xpose.msra.mxu0 0.0
        %894 = vmatprep.subr.mxu0 0.0
        %895 = vmatpush1.xpose.msra.mxu0 0.0
        %896 = vmatprep.subr.mxu0 0.0
        %897 = vmatpush1.xpose.msra.mxu0 0.0
        %898 = vmatprep.subr.mxu0 0.0
        %899 = vmatpush1.xpose.msra.mxu0 0.0
        %900 = vmatprep.subr.mxu0 0.0
        %901 = vmatpush1.xpose.msra.mxu0 0.0
        %902 = vmatprep.subr.mxu0 0.0
        %903 = vmatpush1.xpose.msra.mxu0 0.0
        %904 = vmatprep.mubr.f32.mxu0 0.0
        %905 = vmatmul.mubr.f32.gmra.mrb[0].mxu0 %v832
        %v906 = vpop.f32.mrb[0].mxu0
        %v907 = vadd.f32 0.0, %v906
        %v908 = vpop.f32.mrb[0].mxu0
        %909 = vdwg.mxu0
        %vm910 = vcmask 130048
        %v911 = vsel %vm910, %v828, -inf
        %912 = vmax.xlane.f32.xlu0 %v911
        %v913 = vpop.xlane.xlu0 %912
        %v914 = vsel %vm910, %v907, -inf
        %915 = vmax.xlane.f32.xlu0 %v914
        %v916 = vpop.xlane.xlu0 %915
        %v917 = vsub.f32 %v828, %v913
        %v918 = vsub.f32 %v907, %v916
        %v919 = vmul.f32 %v917, 1.442695
        %v920 = vpow.pop %v919
        %v921 = vmul.f32 %v918, 1.442695
        %v922 = vpow.pop %v921
        %v923 = vsel %vm910, %v920, 0.0
        %924 = vadd.xlane.f32.xlu0 %v923
        %v925 = vpop.xlane.xlu0 %924
        %v926 = vsel %vm910, %v922, 0.0
        %927 = vadd.xlane.f32.xlu0 %v926
        %v928 = vpop.xlane.xlu0 %927
        %v930 = vsel %vm910, %v920, 0
        %932 = vmatprep.subr.mxu0 0.0
        %933 = vmatpush1.msra.mxu0 %v733
        %934 = vmatprep.subr.mxu0 0.0
        %935 = vmatpush1.msra.mxu0 %v738
        %936 = vmatprep.subr.mxu0 0.0
        %937 = vmatpush1.msra.mxu0 0.0
        %938 = vmatprep.subr.mxu0 0.0
        %939 = vmatpush1.msra.mxu0 0.0
        %940 = vmatprep.subr.mxu0 0.0
        %941 = vmatpush1.msra.mxu0 0.0
        %942 = vmatprep.subr.mxu0 0.0
        %943 = vmatpush1.msra.mxu0 0.0
        %944 = vmatprep.subr.mxu0 0.0
        %945 = vmatpush1.msra.mxu0 0.0
        %946 = vmatprep.subr.mxu0 0.0
        %947 = vmatpush1.msra.mxu0 0.0
        %948 = vmatprep.subr.mxu0 0.0
        %949 = vmatpush1.msra.mxu0 0.0
        %950 = vmatprep.subr.mxu0 0.0
        %951 = vmatpush1.msra.mxu0 0.0
        %952 = vmatprep.subr.mxu0 0.0
        %953 = vmatpush1.msra.mxu0 0.0
        %954 = vmatprep.subr.mxu0 0.0
        %955 = vmatpush1.msra.mxu0 0.0
        %956 = vmatprep.subr.mxu0 0.0
        %957 = vmatpush1.msra.mxu0 0.0
        %958 = vmatprep.subr.mxu0 0.0
        %959 = vmatpush1.msra.mxu0 0.0
        %960 = vmatprep.subr.mxu0 0.0
        %961 = vmatpush1.msra.mxu0 0.0
        %962 = vmatprep.subr.mxu0 0.0
        %963 = vmatpush1.msra.mxu0 0.0
        %964 = vmatprep.subr.mxu0 0.0
        %965 = vmatpush1.msra.mxu0 0.0
        %966 = vmatprep.subr.mxu0 0.0
        %967 = vmatpush1.msra.mxu0 0.0
        %968 = vmatprep.subr.mxu0 0.0
        %969 = vmatpush1.msra.mxu0 0.0
        %970 = vmatprep.subr.mxu0 0.0
        %971 = vmatpush1.msra.mxu0 0.0
        %972 = vmatprep.subr.mxu0 0.0
        %973 = vmatpush1.msra.mxu0 0.0
        %974 = vmatprep.subr.mxu0 0.0
        %975 = vmatpush1.msra.mxu0 0.0
        %976 = vmatprep.subr.mxu0 0.0
        %977 = vmatpush1.msra.mxu0 0.0
        %978 = vmatprep.subr.mxu0 0.0
        %979 = vmatpush1.msra.mxu0 0.0
        %980 = vmatprep.subr.mxu0 0.0
        %981 = vmatpush1.msra.mxu0 0.0
        %982 = vmatprep.subr.mxu0 0.0
        %983 = vmatpush1.msra.mxu0 0.0
        %984 = vmatprep.subr.mxu0 0.0
        %985 = vmatpush1.msra.mxu0 0.0
        %986 = vmatprep.subr.mxu0 0.0
        %987 = vmatpush1.msra.mxu0 0.0
        %988 = vmatprep.subr.mxu0 0.0
        %989 = vmatpush1.msra.mxu0 0.0
        %990 = vmatprep.subr.mxu0 0.0
        %991 = vmatpush1.msra.mxu0 0.0
        %992 = vmatprep.subr.mxu0 0.0
        %993 = vmatpush1.msra.mxu0 0.0
        %994 = vmatprep.subr.mxu0 0.0
        %995 = vmatpush1.msra.mxu0 0.0
        %996 = vmatprep.mubr.f32.mxu0 0.0
        %997 = vmatmul.mubr.f32.gmra.mrb[0].mxu0 %v930
        %v998 = vpop.f32.mrb[0].mxu0
        %v999 = vadd.f32 0.0, %v998
        %v1000 = vpop.f32.mrb[0].mxu0
        %1001 = vdwg.mxu0
        %v1003 = vsel %vm910, %v922, 0
        %1005 = vmatprep.subr.mxu0 0.0
        %1006 = vmatpush1.msra.mxu0 %v743
        %1007 = vmatprep.subr.mxu0 0.0
        %1008 = vmatpush1.msra.mxu0 %v748
        %1009 = vmatprep.subr.mxu0 0.0
        %1010 = vmatpush1.msra.mxu0 0.0
        %1011 = vmatprep.subr.mxu0 0.0
        %1012 = vmatpush1.msra.mxu0 0.0
        %1013 = vmatprep.subr.mxu0 0.0
        %1014 = vmatpush1.msra.mxu0 0.0
        %1015 = vmatprep.subr.mxu0 0.0
        %1016 = vmatpush1.msra.mxu0 0.0
        %1017 = vmatprep.subr.mxu0 0.0
        %1018 = vmatpush1.msra.mxu0 0.0
        %1019 = vmatprep.subr.mxu0 0.0
        %1020 = vmatpush1.msra.mxu0 0.0
        %1021 = vmatprep.subr.mxu0 0.0
        %1022 = vmatpush1.msra.mxu0 0.0
        %1023 = vmatprep.subr.mxu0 0.0
        %1024 = vmatpush1.msra.mxu0 0.0
        %1025 = vmatprep.subr.mxu0 0.0
        %1026 = vmatpush1.msra.mxu0 0.0
        %1027 = vmatprep.subr.mxu0 0.0
        %1028 = vmatpush1.msra.mxu0 0.0
        %1029 = vmatprep.subr.mxu0 0.0
        %1030 = vmatpush1.msra.mxu0 0.0
        %1031 = vmatprep.subr.mxu0 0.0
        %1032 = vmatpush1.msra.mxu0 0.0
        %1033 = vmatprep.subr.mxu0 0.0
        %1034 = vmatpush1.msra.mxu0 0.0
        %1035 = vmatprep.subr.mxu0 0.0
        %1036 = vmatpush1.msra.mxu0 0.0
        %1037 = vmatprep.subr.mxu0 0.0
        %1038 = vmatpush1.msra.mxu0 0.0
        %1039 = vmatprep.subr.mxu0 0.0
        %1040 = vmatpush1.msra.mxu0 0.0
        %1041 = vmatprep.subr.mxu0 0.0
        %1042 = vmatpush1.msra.mxu0 0.0
        %1043 = vmatprep.subr.mxu0 0.0
        %1044 = vmatpush1.msra.mxu0 0.0
        %1045 = vmatprep.subr.mxu0 0.0
        %1046 = vmatpush1.msra.mxu0 0.0
        %1047 = vmatprep.subr.mxu0 0.0
        %1048 = vmatpush1.msra.mxu0 0.0
        %1049 = vmatprep.subr.mxu0 0.0
        %1050 = vmatpush1.msra.mxu0 0.0
        %1051 = vmatprep.subr.mxu0 0.0
        %1052 = vmatpush1.msra.mxu0 0.0
        %1053 = vmatprep.subr.mxu0 0.0
        %1054 = vmatpush1.msra.mxu0 0.0
        %1055 = vmatprep.subr.mxu0 0.0
        %1056 = vmatpush1.msra.mxu0 0.0
        %1057 = vmatprep.subr.mxu0 0.0
        %1058 = vmatpush1.msra.mxu0 0.0
        %1059 = vmatprep.subr.mxu0 0.0
        %1060 = vmatpush1.msra.mxu0 0.0
        %1061 = vmatprep.subr.mxu0 0.0
        %1062 = vmatpush1.msra.mxu0 0.0
        %1063 = vmatprep.subr.mxu0 0.0
        %1064 = vmatpush1.msra.mxu0 0.0
        %1065 = vmatprep.subr.mxu0 0.0
        %1066 = vmatpush1.msra.mxu0 0.0
        %1067 = vmatprep.subr.mxu0 0.0
        %1068 = vmatpush1.msra.mxu0 0.0
        %1069 = vmatprep.mubr.f32.mxu0 0.0
        %1070 = vmatmul.mubr.f32.gmra.mrb[0].mxu0 %v1003
        %v1071 = vpop.f32.mrb[0].mxu0
        %v1072 = vadd.f32 0.0, %v1071
        %v1073 = vpop.f32.mrb[0].mxu0
        %1074 = vdwg.mxu0
        %v1075 = vrcp.pop %v925
        %v1076 = vrcp.pop %v928
        %v1077 = vmul.f32 %v999, %v1075
        %v1078 = vmul.f32 %v1072, %v1076
        %1079 = vrot.lane.b32.xlu0 %v519, 120
        %v1080 = vpop.permute.xlu0 %1079
        %1081 = vrot.lane.b32.xlu0 %v621, 120
        %v1082 = vpop.permute.xlu0 %1081
        %1083 = vrot.lane.b32.xlu0 %v626, 120
        %v1084 = vpop.permute.xlu0 %1083
        %v1085 = vsel %vm751, %v1080, 0
        %v1087 = vsel %vm751, %v1082, 0
        %v1089 = vsel %vm751, %v1084, 0
        %1091 = vmatprep.subr.mxu0 0.0
        %1092 = vmatpush1.xpose.msra.mxu0 %v1087
        %1093 = vmatprep.subr.mxu0 0.0
        %1094 = vmatpush1.xpose.msra.mxu0 %v1089
        %1095 = vmatprep.subr.mxu0 0.0
        %1096 = vmatpush1.xpose.msra.mxu0 0.0
        %1097 = vmatprep.subr.mxu0 0.0
        %1098 = vmatpush1.xpose.msra.mxu0 0.0
        %1099 = vmatprep.subr.mxu0 0.0
        %1100 = vmatpush1.xpose.msra.mxu0 0.0
        %1101 = vmatprep.subr.mxu0 0.0
        %1102 = vmatpush1.xpose.msra.mxu0 0.0
        %1103 = vmatprep.subr.mxu0 0.0
        %1104 = vmatpush1.xpose.msra.mxu0 0.0
        %1105 = vmatprep.subr.mxu0 0.0
        %1106 = vmatpush1.xpose.msra.mxu0 0.0
        %1107 = vmatprep.subr.mxu0 0.0
        %1108 = vmatpush1.xpose.msra.mxu0 0.0
        %1109 = vmatprep.subr.mxu0 0.0
        %1110 = vmatpush1.xpose.msra.mxu0 0.0
        %1111 = vmatprep.subr.mxu0 0.0
        %1112 = vmatpush1.xpose.msra.mxu0 0.0
        %1113 = vmatprep.subr.mxu0 0.0
        %1114 = vmatpush1.xpose.msra.mxu0 0.0
        %1115 = vmatprep.subr.mxu0 0.0
        %1116 = vmatpush1.xpose.msra.mxu0 0.0
        %1117 = vmatprep.subr.mxu0 0.0
        %1118 = vmatpush1.xpose.msra.mxu0 0.0
        %1119 = vmatprep.subr.mxu0 0.0
        %1120 = vmatpush1.xpose.msra.mxu0 0.0
        %1121 = vmatprep.subr.mxu0 0.0
        %1122 = vmatpush1.xpose.msra.mxu0 0.0
        %1123 = vmatprep.subr.mxu0 0.0
        %1124 = vmatpush1.xpose.msra.mxu0 0.0
        %1125 = vmatprep.subr.mxu0 0.0
        %1126 = vmatpush1.xpose.msra.mxu0 0.0
        %1127 = vmatprep.subr.mxu0 0.0
        %1128 = vmatpush1.xpose.msra.mxu0 0.0
        %1129 = vmatprep.subr.mxu0 0.0
        %1130 = vmatpush1.xpose.msra.mxu0 0.0
        %1131 = vmatprep.subr.mxu0 0.0
        %1132 = vmatpush1.xpose.msra.mxu0 0.0
        %1133 = vmatprep.subr.mxu0 0.0
        %1134 = vmatpush1.xpose.msra.mxu0 0.0
        %1135 = vmatprep.subr.mxu0 0.0
        %1136 = vmatpush1.xpose.msra.mxu0 0.0
        %1137 = vmatprep.subr.mxu0 0.0
        %1138 = vmatpush1.xpose.msra.mxu0 0.0
        %1139 = vmatprep.subr.mxu0 0.0
        %1140 = vmatpush1.xpose.msra.mxu0 0.0
        %1141 = vmatprep.subr.mxu0 0.0
        %1142 = vmatpush1.xpose.msra.mxu0 0.0
        %1143 = vmatprep.subr.mxu0 0.0
        %1144 = vmatpush1.xpose.msra.mxu0 0.0
        %1145 = vmatprep.subr.mxu0 0.0
        %1146 = vmatpush1.xpose.msra.mxu0 0.0
        %1147 = vmatprep.subr.mxu0 0.0
        %1148 = vmatpush1.xpose.msra.mxu0 0.0
        %1149 = vmatprep.subr.mxu0 0.0
        %1150 = vmatpush1.xpose.msra.mxu0 0.0
        %1151 = vmatprep.subr.mxu0 0.0
        %1152 = vmatpush1.xpose.msra.mxu0 0.0
        %1153 = vmatprep.subr.mxu0 0.0
        %1154 = vmatpush1.xpose.msra.mxu0 0.0
        %1155 = vmatprep.mubr.f32.mxu0 0.0
        %1156 = vmatmul.mubr.f32.gmra.mrb[0].mxu0 %v1085
        %v1157 = vpop.f32.mrb[0].mxu0
        %v1158 = vadd.f32 0.0, %v1157
        %v1159 = vpop.f32.mrb[0].mxu0
        %1160 = vdwg.mxu0
        %1161 = vrot.lane.b32.xlu0 %v524, 120
        %v1162 = vpop.permute.xlu0 %1161
        %1163 = vrot.lane.b32.xlu0 %v631, 120
        %v1164 = vpop.permute.xlu0 %1163
        %1165 = vrot.lane.b32.xlu0 %v636, 120
        %v1166 = vpop.permute.xlu0 %1165
        %v1167 = vsel %vm751, %v1162, 0
        %v1169 = vsel %vm751, %v1164, 0
        %v1171 = vsel %vm751, %v1166, 0
        %1173 = vmatprep.subr.mxu0 0.0
        %1174 = vmatpush1.xpose.msra.mxu0 %v1169
        %1175 = vmatprep.subr.mxu0 0.0
        %1176 = vmatpush1.xpose.msra.mxu0 %v1171
        %1177 = vmatprep.subr.mxu0 0.0
        %1178 = vmatpush1.xpose.msra.mxu0 0.0
        %1179 = vmatprep.subr.mxu0 0.0
        %1180 = vmatpush1.xpose.msra.mxu0 0.0
        %1181 = vmatprep.subr.mxu0 0.0
        %1182 = vmatpush1.xpose.msra.mxu0 0.0
        %1183 = vmatprep.subr.mxu0 0.0
        %1184 = vmatpush1.xpose.msra.mxu0 0.0
        %1185 = vmatprep.subr.mxu0 0.0
        %1186 = vmatpush1.xpose.msra.mxu0 0.0
        %1187 = vmatprep.subr.mxu0 0.0
        %1188 = vmatpush1.xpose.msra.mxu0 0.0
        %1189 = vmatprep.subr.mxu0 0.0
        %1190 = vmatpush1.xpose.msra.mxu0 0.0
        %1191 = vmatprep.subr.mxu0 0.0
        %1192 = vmatpush1.xpose.msra.mxu0 0.0
        %1193 = vmatprep.subr.mxu0 0.0
        %1194 = vmatpush1.xpose.msra.mxu0 0.0
        %1195 = vmatprep.subr.mxu0 0.0
        %1196 = vmatpush1.xpose.msra.mxu0 0.0
        %1197 = vmatprep.subr.mxu0 0.0
        %1198 = vmatpush1.xpose.msra.mxu0 0.0
        %1199 = vmatprep.subr.mxu0 0.0
        %1200 = vmatpush1.xpose.msra.mxu0 0.0
        %1201 = vmatprep.subr.mxu0 0.0
        %1202 = vmatpush1.xpose.msra.mxu0 0.0
        %1203 = vmatprep.subr.mxu0 0.0
        %1204 = vmatpush1.xpose.msra.mxu0 0.0
        %1205 = vmatprep.subr.mxu0 0.0
        %1206 = vmatpush1.xpose.msra.mxu0 0.0
        %1207 = vmatprep.subr.mxu0 0.0
        %1208 = vmatpush1.xpose.msra.mxu0 0.0
        %1209 = vmatprep.subr.mxu0 0.0
        %1210 = vmatpush1.xpose.msra.mxu0 0.0
        %1211 = vmatprep.subr.mxu0 0.0
        %1212 = vmatpush1.xpose.msra.mxu0 0.0
        %1213 = vmatprep.subr.mxu0 0.0
        %1214 = vmatpush1.xpose.msra.mxu0 0.0
        %1215 = vmatprep.subr.mxu0 0.0
        %1216 = vmatpush1.xpose.msra.mxu0 0.0
        %1217 = vmatprep.subr.mxu0 0.0
        %1218 = vmatpush1.xpose.msra.mxu0 0.0
        %1219 = vmatprep.subr.mxu0 0.0
        %1220 = vmatpush1.xpose.msra.mxu0 0.0
        %1221 = vmatprep.subr.mxu0 0.0
        %1222 = vmatpush1.xpose.msra.mxu0 0.0
        %1223 = vmatprep.subr.mxu0 0.0
        %1224 = vmatpush1.xpose.msra.mxu0 0.0
        %1225 = vmatprep.subr.mxu0 0.0
        %1226 = vmatpush1.xpose.msra.mxu0 0.0
        %1227 = vmatprep.subr.mxu0 0.0
        %1228 = vmatpush1.xpose.msra.mxu0 0.0
        %1229 = vmatprep.subr.mxu0 0.0
        %1230 = vmatpush1.xpose.msra.mxu0 0.0
        %1231 = vmatprep.subr.mxu0 0.0
        %1232 = vmatpush1.xpose.msra.mxu0 0.0
        %1233 = vmatprep.subr.mxu0 0.0
        %1234 = vmatpush1.xpose.msra.mxu0 0.0
        %1235 = vmatprep.subr.mxu0 0.0
        %1236 = vmatpush1.xpose.msra.mxu0 0.0
        %1237 = vmatprep.mubr.f32.mxu0 0.0
        %1238 = vmatmul.mubr.f32.gmra.mrb[0].mxu0 %v1167
        %v1239 = vpop.f32.mrb[0].mxu0
        %v1240 = vadd.f32 0.0, %v1239
        %v1241 = vpop.f32.mrb[0].mxu0
        %1242 = vdwg.mxu0
        %v1243 = vsel %vm910, %v1158, -inf
        %1244 = vmax.xlane.f32.xlu0 %v1243
        %v1245 = vpop.xlane.xlu0 %1244
        %v1246 = vsel %vm910, %v1240, -inf
        %1247 = vmax.xlane.f32.xlu0 %v1246
        %v1248 = vpop.xlane.xlu0 %1247
        %v1249 = vsub.f32 %v1158, %v1245
        %v1250 = vsub.f32 %v1240, %v1248
        %v1251 = vmul.f32 %v1249, 1.442695
        %v1252 = vpow.pop %v1251
        %v1253 = vmul.f32 %v1250, 1.442695
        %v1254 = vpow.pop %v1253
        %v1255 = vsel %vm910, %v1252, 0.0
        %1256 = vadd.xlane.f32.xlu0 %v1255
        %v1257 = vpop.xlane.xlu0 %1256
        %v1258 = vsel %vm910, %v1254, 0.0
        %1259 = vadd.xlane.f32.xlu0 %v1258
        %v1260 = vpop.xlane.xlu0 %1259
        %1263 = vrot.lane.b32.xlu0 %v733, 120
        %v1264 = vpop.permute.xlu0 %1263
        %1265 = vrot.lane.b32.xlu0 %v738, 120
        %v1266 = vpop.permute.xlu0 %1265
        %v1270 = vsel %vm910, %v1252, 0
        %1272 = vmatprep.subr.mxu0 0.0
        %1273 = vmatpush1.msra.mxu0 %v1264
        %1274 = vmatprep.subr.mxu0 0.0
        %1275 = vmatpush1.msra.mxu0 %v1266
        %1276 = vmatprep.subr.mxu0 0.0
        %1277 = vmatpush1.msra.mxu0 0.0
        %1278 = vmatprep.subr.mxu0 0.0
        %1279 = vmatpush1.msra.mxu0 0.0
        %1280 = vmatprep.subr.mxu0 0.0
        %1281 = vmatpush1.msra.mxu0 0.0
        %1282 = vmatprep.subr.mxu0 0.0
        %1283 = vmatpush1.msra.mxu0 0.0
        %1284 = vmatprep.subr.mxu0 0.0
        %1285 = vmatpush1.msra.mxu0 0.0
        %1286 = vmatprep.subr.mxu0 0.0
        %1287 = vmatpush1.msra.mxu0 0.0
        %1288 = vmatprep.subr.mxu0 0.0
        %1289 = vmatpush1.msra.mxu0 0.0
        %1290 = vmatprep.subr.mxu0 0.0
        %1291 = vmatpush1.msra.mxu0 0.0
        %1292 = vmatprep.subr.mxu0 0.0
        %1293 = vmatpush1.msra.mxu0 0.0
        %1294 = vmatprep.subr.mxu0 0.0
        %1295 = vmatpush1.msra.mxu0 0.0
        %1296 = vmatprep.subr.mxu0 0.0
        %1297 = vmatpush1.msra.mxu0 0.0
        %1298 = vmatprep.subr.mxu0 0.0
        %1299 = vmatpush1.msra.mxu0 0.0
        %1300 = vmatprep.subr.mxu0 0.0
        %1301 = vmatpush1.msra.mxu0 0.0
        %1302 = vmatprep.subr.mxu0 0.0
        %1303 = vmatpush1.msra.mxu0 0.0
        %1304 = vmatprep.subr.mxu0 0.0
        %1305 = vmatpush1.msra.mxu0 0.0
        %1306 = vmatprep.subr.mxu0 0.0
        %1307 = vmatpush1.msra.mxu0 0.0
        %1308 = vmatprep.subr.mxu0 0.0
        %1309 = vmatpush1.msra.mxu0 0.0
        %1310 = vmatprep.subr.mxu0 0.0
        %1311 = vmatpush1.msra.mxu0 0.0
        %1312 = vmatprep.subr.mxu0 0.0
        %1313 = vmatpush1.msra.mxu0 0.0
        %1314 = vmatprep.subr.mxu0 0.0
        %1315 = vmatpush1.msra.mxu0 0.0
        %1316 = vmatprep.subr.mxu0 0.0
        %1317 = vmatpush1.msra.mxu0 0.0
        %1318 = vmatprep.subr.mxu0 0.0
        %1319 = vmatpush1.msra.mxu0 0.0
        %1320 = vmatprep.subr.mxu0 0.0
        %1321 = vmatpush1.msra.mxu0 0.0
        %1322 = vmatprep.subr.mxu0 0.0
        %1323 = vmatpush1.msra.mxu0 0.0
        %1324 = vmatprep.subr.mxu0 0.0
        %1325 = vmatpush1.msra.mxu0 0.0
        %1326 = vmatprep.subr.mxu0 0.0
        %1327 = vmatpush1.msra.mxu0 0.0
        %1328 = vmatprep.subr.mxu0 0.0
        %1329 = vmatpush1.msra.mxu0 0.0
        %1330 = vmatprep.subr.mxu0 0.0
        %1331 = vmatpush1.msra.mxu0 0.0
        %1332 = vmatprep.subr.mxu0 0.0
        %1333 = vmatpush1.msra.mxu0 0.0
        %1334 = vmatprep.subr.mxu0 0.0
        %1335 = vmatpush1.msra.mxu0 0.0
        %1336 = vmatprep.mubr.f32.mxu0 0.0
        %1337 = vmatmul.mubr.f32.gmra.mrb[0].mxu0 %v1270
        %v1338 = vpop.f32.mrb[0].mxu0
        %v1339 = vadd.f32 0.0, %v1338
        %v1340 = vpop.f32.mrb[0].mxu0
        %1341 = vdwg.mxu0
        %1344 = vrot.lane.b32.xlu0 %v743, 120
        %v1345 = vpop.permute.xlu0 %1344
        %1346 = vrot.lane.b32.xlu0 %v748, 120
        %v1347 = vpop.permute.xlu0 %1346
        %v1351 = vsel %vm910, %v1254, 0
        %1353 = vmatprep.subr.mxu0 0.0
        %1354 = vmatpush1.msra.mxu0 %v1345
        %1355 = vmatprep.subr.mxu0 0.0
        %1356 = vmatpush1.msra.mxu0 %v1347
        %1357 = vmatprep.subr.mxu0 0.0
        %1358 = vmatpush1.msra.mxu0 0.0
        %1359 = vmatprep.subr.mxu0 0.0
        %1360 = vmatpush1.msra.mxu0 0.0
        %1361 = vmatprep.subr.mxu0 0.0
        %1362 = vmatpush1.msra.mxu0 0.0
        %1363 = vmatprep.subr.mxu0 0.0
        %1364 = vmatpush1.msra.mxu0 0.0
        %1365 = vmatprep.subr.mxu0 0.0
        %1366 = vmatpush1.msra.mxu0 0.0
        %1367 = vmatprep.subr.mxu0 0.0
        %1368 = vmatpush1.msra.mxu0 0.0
        %1369 = vmatprep.subr.mxu0 0.0
        %1370 = vmatpush1.msra.mxu0 0.0
        %1371 = vmatprep.subr.mxu0 0.0
        %1372 = vmatpush1.msra.mxu0 0.0
        %1373 = vmatprep.subr.mxu0 0.0
        %1374 = vmatpush1.msra.mxu0 0.0
        %1375 = vmatprep.subr.mxu0 0.0
        %1376 = vmatpush1.msra.mxu0 0.0
        %1377 = vmatprep.subr.mxu0 0.0
        %1378 = vmatpush1.msra.mxu0 0.0
        %1379 = vmatprep.subr.mxu0 0.0
        %1380 = vmatpush1.msra.mxu0 0.0
        %1381 = vmatprep.subr.mxu0 0.0
        %1382 = vmatpush1.msra.mxu0 0.0
        %1383 = vmatprep.subr.mxu0 0.0
        %1384 = vmatpush1.msra.mxu0 0.0
        %1385 = vmatprep.subr.mxu0 0.0
        %1386 = vmatpush1.msra.mxu0 0.0
        %1387 = vmatprep.subr.mxu0 0.0
        %1388 = vmatpush1.msra.mxu0 0.0
        %1389 = vmatprep.subr.mxu0 0.0
        %1390 = vmatpush1.msra.mxu0 0.0
        %1391 = vmatprep.subr.mxu0 0.0
        %1392 = vmatpush1.msra.mxu0 0.0
        %1393 = vmatprep.subr.mxu0 0.0
        %1394 = vmatpush1.msra.mxu0 0.0
        %1395 = vmatprep.subr.mxu0 0.0
        %1396 = vmatpush1.msra.mxu0 0.0
        %1397 = vmatprep.subr.mxu0 0.0
        %1398 = vmatpush1.msra.mxu0 0.0
        %1399 = vmatprep.subr.mxu0 0.0
        %1400 = vmatpush1.msra.mxu0 0.0
        %1401 = vmatprep.subr.mxu0 0.0
        %1402 = vmatpush1.msra.mxu0 0.0
        %1403 = vmatprep.subr.mxu0 0.0
        %1404 = vmatpush1.msra.mxu0 0.0
        %1405 = vmatprep.subr.mxu0 0.0
        %1406 = vmatpush1.msra.mxu0 0.0
        %1407 = vmatprep.subr.mxu0 0.0
        %1408 = vmatpush1.msra.mxu0 0.0
        %1409 = vmatprep.subr.mxu0 0.0
        %1410 = vmatpush1.msra.mxu0 0.0
        %1411 = vmatprep.subr.mxu0 0.0
        %1412 = vmatpush1.msra.mxu0 0.0
        %1413 = vmatprep.subr.mxu0 0.0
        %1414 = vmatpush1.msra.mxu0 0.0
        %1415 = vmatprep.subr.mxu0 0.0
        %1416 = vmatpush1.msra.mxu0 0.0
        %1417 = vmatprep.mubr.f32.mxu0 0.0
        %1418 = vmatmul.mubr.f32.gmra.mrb[0].mxu0 %v1351
        %v1419 = vpop.f32.mrb[0].mxu0
        %v1420 = vadd.f32 0.0, %v1419
        %v1421 = vpop.f32.mrb[0].mxu0
        %1422 = vdwg.mxu0
        %v1423 = vrcp.pop %v1257
        %v1424 = vrcp.pop %v1260
        %v1425 = vmul.f32 %v1339, %v1423
        %v1426 = vmul.f32 %v1420, %v1424
        %1429 = vrot.lane.b32.xlu0 %v1425, 8
        %v1430 = vpop.permute.xlu0 %1429
        %1431 = vrot.lane.b32.xlu0 %v1426, 8
        %v1432 = vpop.permute.xlu0 %1431
        %v1435 = vsel %vm751, %v1077, %v1430
        %v1436 = vsel %vm751, %v1078, %v1432
        %v1437 = vld [vmem:[%s9] sm:$0xff]
        %v1438 = vld [vmem:[%s9 + $0x8] sm:$0xff]
        %v1439 = vld [vmem:[%s10] sm:$0x1]
        %v1441 = vlaneseq
        %v1442 = vshrl.u32 %v1441, 7
        %v1443 = vsub.s32 0, %v1442
        %v1444 = vrot.slane %v1439, %v1443
        %v1447 = vsel %vm910, %v1435, 0
        %v1450 = vsel %vm910, %v1436, 0
        %1452 = vmatprep.subr.mxu0 0.0
        %1453 = vmatpush1.msra.mxu0 %v1437
        %1454 = vmatprep.subr.mxu0 0.0
        %1455 = vmatpush1.msra.mxu0 %v1438
        %1456 = vmatprep.subr.mxu0 0.0
        %1457 = vmatpush1.msra.mxu0 0.0
        %1458 = vmatprep.subr.mxu0 0.0
        %1459 = vmatpush1.msra.mxu0 0.0
        %1460 = vmatprep.subr.mxu0 0.0
        %1461 = vmatpush1.msra.mxu0 0.0
        %1462 = vmatprep.subr.mxu0 0.0
        %1463 = vmatpush1.msra.mxu0 0.0
        %1464 = vmatprep.subr.mxu0 0.0
        %1465 = vmatpush1.msra.mxu0 0.0
        %1466 = vmatprep.subr.mxu0 0.0
        %1467 = vmatpush1.msra.mxu0 0.0
        %1468 = vmatprep.subr.mxu0 0.0
        %1469 = vmatpush1.msra.mxu0 0.0
        %1470 = vmatprep.subr.mxu0 0.0
        %1471 = vmatpush1.msra.mxu0 0.0
        %1472 = vmatprep.subr.mxu0 0.0
        %1473 = vmatpush1.msra.mxu0 0.0
        %1474 = vmatprep.subr.mxu0 0.0
        %1475 = vmatpush1.msra.mxu0 0.0
        %1476 = vmatprep.subr.mxu0 0.0
        %1477 = vmatpush1.msra.mxu0 0.0
        %1478 = vmatprep.subr.mxu0 0.0
        %1479 = vmatpush1.msra.mxu0 0.0
        %1480 = vmatprep.subr.mxu0 0.0
        %1481 = vmatpush1.msra.mxu0 0.0
        %1482 = vmatprep.subr.mxu0 0.0
        %1483 = vmatpush1.msra.mxu0 0.0
        %1484 = vmatprep.subr.mxu0 0.0
        %1485 = vmatpush1.msra.mxu0 0.0
        %1486 = vmatprep.subr.mxu0 0.0
        %1487 = vmatpush1.msra.mxu0 0.0
        %1488 = vmatprep.subr.mxu0 0.0
        %1489 = vmatpush1.msra.mxu0 0.0
        %1490 = vmatprep.subr.mxu0 0.0
        %1491 = vmatpush1.msra.mxu0 0.0
        %1492 = vmatprep.subr.mxu0 0.0
        %1493 = vmatpush1.msra.mxu0 0.0
        %1494 = vmatprep.subr.mxu0 0.0
        %1495 = vmatpush1.msra.mxu0 0.0
        %1496 = vmatprep.subr.mxu0 0.0
        %1497 = vmatpush1.msra.mxu0 0.0
        %1498 = vmatprep.subr.mxu0 0.0
        %1499 = vmatpush1.msra.mxu0 0.0
        %1500 = vmatprep.subr.mxu0 0.0
        %1501 = vmatpush1.msra.mxu0 0.0
        %1502 = vmatprep.subr.mxu0 0.0
        %1503 = vmatpush1.msra.mxu0 0.0
        %1504 = vmatprep.subr.mxu0 0.0
        %1505 = vmatpush1.msra.mxu0 0.0
        %1506 = vmatprep.subr.mxu0 0.0
        %1507 = vmatpush1.msra.mxu0 0.0
        %1508 = vmatprep.subr.mxu0 0.0
        %1509 = vmatpush1.msra.mxu0 0.0
        %1510 = vmatprep.subr.mxu0 0.0
        %1511 = vmatpush1.msra.mxu0 0.0
        %1512 = vmatprep.subr.mxu0 0.0
        %1513 = vmatpush1.msra.mxu0 0.0
        %1514 = vmatprep.subr.mxu0 0.0
        %1515 = vmatpush1.msra.mxu0 0.0
        %1516 = vmatprep.mubr.f32.mxu0 0.0
        %1517 = vmatmul.mubr.f32.gmra.mrb[0].mxu0 %v1447
        %v1518 = vpop.f32.mrb[0].mxu0
        %v1519 = vadd.f32 %v1444, %v1518
        %v1520 = vpop.f32.mrb[0].mxu0
        %1521 = vmatprep.mubr.f32.mxu0 0.0
        %1522 = vmatmul.mubr.f32.gmra.mrb[0].mxu0 %v1450
        %v1523 = vpop.f32.mrb[0].mxu0
        %v1524 = vadd.f32 %v1444, %v1523
        %v1525 = vpop.f32.mrb[0].mxu0
        %1526 = vdwg.mxu0
        %1527 = vst.msk [vmem:[%s412] sm:$0xff] %vm445, %v1519
        %1528 = vst.msk [vmem:[%s412 + $0x8] sm:$0xff] %vm445, %v1524
        %s1529 = sand.u32 %s279, 1
        %s1530 = scalar_lea.sflag [#allocation3], %s1529
        %s1531 = sand.u32 %s279, 1
        %s1532 = smul.addr %s1531, 16
        %s1533 = scalar_lea.vmem [#allocation2], %s1532
        // Predicated region
        $region65: #{tpu_custom_call.1} parent=63 // pred_check
          %p1534 = pneg %p289
        $region66: #{tpu_custom_call.1} parent=63 // pred_check_branch
          %1536 = sbr.rel (%p1534) target = $region68
        $region67: #{tpu_custom_call.1} parent=63 // pred_region
          %s1537 = smul.u32 2, %s25
          %s1539 = ssub.s32 256, 256
          %1540 = vsyncadd %s1530, %s1539
          %s1541 = smul.addr %s1537, 128
          %s1542 = scalar_lea.hbm %s11, %s1541
          %s1543 = sshll.u32 %s1533, 4
          %s1544 = int_to_ptr.vmem [resolvable:$true] %s1543
          %1549 = dma.vmem_to_hbm [thread:$0]  %s1544, 256, %s1542, %s1530, 128, 128, 8
        $region68: #{tpu_custom_call.1} parent=63 // pred_fallthru
          _
      $region64: #{tpu_custom_call.1} parent=5 // pred_fallthru
        _
      %p1550 = scmp.le.s32.totalorder 2, %s20
      // Predicated region
      $region69: #{tpu_custom_call.1} parent=5 // pred_check
        %p1551 = pneg %p1550
      $region70: #{tpu_custom_call.1} parent=5 // pred_check_branch
        %1553 = sbr.rel (%p1551) target = $region72
      $region71: #{tpu_custom_call.1} parent=5 // pred_region
        %s1554 = ssub.s32 %s20, 2
        // Predicated region
        $region73: #{tpu_custom_call.1} parent=71 // pred_check
          %p1555 = pneg %p295
        $region74: #{tpu_custom_call.1} parent=71 // pred_check_branch
          %1557 = sbr.rel (%p1555) target = $region76
        $region75: #{tpu_custom_call.1} parent=71 // pred_region
          %s1558 = sand.u32 %s280, 1
          %s1559 = scalar_lea.sflag [#allocation3], %s1558
          %s1560 = sand.u32 %s280, 1
          %s1561 = smul.addr %s1560, 16
          %s1562 = scalar_lea.vmem [#allocation2], %s1561
          %1563 = dma.done %s1559, 256
        $region76: #{tpu_custom_call.1} parent=71 // pred_fallthru
          _
      $region72: #{tpu_custom_call.1} parent=5 // pred_fallthru
        _
    $region6: #{tpu_custom_call.1} parent=1 // loop_footer
      %s24 = sadd.s32 1, %s20
    $region7: #{tpu_custom_call.1} parent=1 // loop_footer_branch
      %19 = sbr.rel target = $region3
    $region8: #{tpu_custom_call.1} parent=1 // loop_exit
      _
    %1564 = vsyncpa [#allocation3], 1
    %s1565 = scalar_lea.sflag [#allocation3], 1
    %1566 = vsyncpa %s1565, 1

</llo_original>
